<compile_context>
chip_gen: v6e
topology: v6e:2x2x1
jax: 0.10.0
libtpu: 0.0.40
codegen_flags: <defaults>
</compile_context>

<pallas_src>
import functools

import jax
import jax.numpy as jnp
from jax.experimental import pallas as pl
from jax.experimental.pallas import tpu as pltpu


# =============================================================================
# Fused kernel: stem conv -> SiLU -> head 1x1 conv -> SiLU -> global avg pool
#               -> (folded 5x dropout) -> classifier matmul
# =============================================================================
def _fused_forward_kernel(p_ref, sw_ref, sb_ref, hw_ref, hb_ref,
                          m_ref, fw_ref, fb_ref, o_ref, acc_ref, *,
                          hw_valid, spatial_tile, inv_hw, drop_scale,
                          needs_mask):
    s = pl.program_id(1)

    @pl.when(s == 0)
    def _init():
        acc_ref[...] = jnp.zeros(acc_ref.shape, acc_ref.dtype)

    # --- stem conv (im2col matmul), bf16 inputs, f32 accumulation on MXU ----
    stem = jnp.dot(p_ref[...], sw_ref[...], preferred_element_type=jnp.float32)
    stem = stem + sb_ref[...]                 # bias folded from BN
    stem = stem * jax.nn.sigmoid(stem)        # SiLU (EUP sigmoid, VPU mul)

    # --- head 1x1 conv to 1280 feature channels -----------------------------
    feats = jnp.dot(stem.astype(hw_ref.dtype), hw_ref[...],
                    preferred_element_type=jnp.float32)
    feats = feats + hb_ref[...]
    feats = feats * jax.nn.sigmoid(feats)     # SiLU

    if needs_mask:
        # Spatial dim was zero-padded up to a multiple of the tile: mask the
        # padded rows so they don't pollute the average pool.
        row = s * spatial_tile + jax.lax.broadcasted_iota(
            jnp.int32, (spatial_tile, 1), 0)
        feats = jnp.where(row < hw_valid, feats, 0.0)

    # --- partial global average pool: accumulate into 8 sublane-aligned rows
    #     (vreg-wise VPU adds only; no per-step cross-sublane XLU reduce).
    n_head = feats.shape[-1]
    acc_ref[...] += feats.reshape(spatial_tile // 8, 8, n_head).sum(axis=0)

    @pl.when(s == pl.num_programs(1) - 1)
    def _finalize():
        # Single cross-sublane reduce + mean normalization.
        pooled = jnp.sum(acc_ref[...], axis=0, keepdims=True) * jnp.float32(inv_hw)
        # Folded ensemble: mean_i fc(drop_i(x)) == fc(x * keep_scale * mask_sum / 5)
        xd = pooled * (m_ref[...] * jnp.float32(drop_scale))
        o_ref[...] = (jnp.dot(xd, fw_ref[...],
                              preferred_element_type=jnp.float32)
                      + fb_ref[...])


def fused_forward(patches, stem_w, stem_b, head_w, head_b,
                  mask_sum, fc_w_pad, fc_b_pad, *,
                  hw_valid, spatial_tile, drop_scale):
    """patches: (B, HW_pad, K_pad) bf16. Returns padded logits (B, N_pad) f32."""
    b, hw_pad, k_pad = patches.shape
    c_stem = stem_w.shape[1]
    n_head = head_w.shape[1]
    n_pad = fc_w_pad.shape[1]
    n_s = hw_pad // spatial_tile

    kernel = functools.partial(
        _fused_forward_kernel,
        hw_valid=hw_valid,
        spatial_tile=spatial_tile,
        inv_hw=1.0 / float(hw_valid),
        drop_scale=drop_scale,
        needs_mask=(hw_pad != hw_valid),
    )

    flops = (2 * b * hw_valid * (k_pad * c_stem + c_stem * n_head)
             + 2 * b * n_head * n_pad)
    bytes_accessed = int(
        patches.size * patches.dtype.itemsize
        + stem_w.size * stem_w.dtype.itemsize
        + head_w.size * head_w.dtype.itemsize
        + fc_w_pad.size * 4
        + (stem_b.size + head_b.size + fc_b_pad.size) * 4
        + mask_sum.size * 4
        + b * n_pad * 4)

    out = pl.pallas_call(
        kernel,
        out_shape=jax.ShapeDtypeStruct((b, 1, n_pad), jnp.float32),
        grid=(b, n_s),
        in_specs=[
            # (Ts, K_pad) spatial tile of im2col patches (batch dim squeezed).
            pl.BlockSpec((None, spatial_tile, k_pad), lambda bi, si: (bi, si, 0)),
            pl.BlockSpec((k_pad, c_stem), lambda bi, si: (0, 0)),
            pl.BlockSpec((1, c_stem), lambda bi, si: (0, 0)),
            pl.BlockSpec((c_stem, n_head), lambda bi, si: (0, 0)),
            pl.BlockSpec((1, n_head), lambda bi, si: (0, 0)),
            # Summed dropout masks, one row per batch element.
            pl.BlockSpec((None, 1, n_head), lambda bi, si: (bi, 0, 0)),
            pl.BlockSpec((n_head, n_pad), lambda bi, si: (0, 0)),
            pl.BlockSpec((1, n_pad), lambda bi, si: (0, 0)),
        ],
        # Same output block for every spatial step of a batch element; written
        # only at the final step (lane-dense, 128-wide).
        out_specs=pl.BlockSpec((None, 1, n_pad), lambda bi, si: (bi, 0, 0)),
        scratch_shapes=[pltpu.VMEM((8, n_head), jnp.float32)],
        compiler_params=pltpu.CompilerParams(
            dimension_semantics=("parallel", "arbitrary")),
        cost_estimate=pl.CostEstimate(
            flops=flops,
            transcendentals=b * hw_valid * (c_stem + n_head),
            bytes_accessed=bytes_accessed),
    )(patches, stem_w, stem_b, head_w, head_b, mask_sum, fc_w_pad, fc_b_pad)
    return out.reshape(b, n_pad)


# =============================================================================
# Plain-JAX glue: NHWC im2col for the 3x3 / stride-2 / pad-1 stem conv
# =============================================================================
def _im2col_3x3_s2_p1(x_nhwc):
    b, h, w, c = x_nhwc.shape
    ho = (h + 2 - 3) // 2 + 1
    wo = (w + 2 - 3) // 2 + 1
    xp = jnp.pad(x_nhwc, ((0, 0), (1, 1), (1, 1), (0, 0)))
    cols = []
    for dh in range(3):
        for dw in range(3):
            cols.append(xp[:, dh:dh + 2 * ho:2, dw:dw + 2 * wo:2, :])
    patches = jnp.concatenate(cols, axis=-1)        # (B, Ho, Wo, 9*C)
    return patches, ho, wo


def _choose_spatial_tile(hw, target=512):
    # 512 rows -> ~2.6 MB f32 of in-kernel feature temporaries: fits v7x's
    # 64 MiB VMEM comfortably; can be raised to 1024-2048 on v5e/v6e.
    if hw >= target:
        return target
    return max(8, ((hw + 7) // 8) * 8)


# =============================================================================
# Parameter init (deterministic, synthetic; BN folded into conv weight/bias)
# =============================================================================
def init_params(key, out_dim=9):
    k1, k2, k3, k4 = jax.random.split(key, 4)
    c_in, c_stem, c_head = 3, 32, 1280
    ck = c_in * 3 * 3                                # 27
    k_pad = 32                                       # pad im2col K 27 -> 32

    stem_w = 0.10 * jax.random.normal(k1, (ck, c_stem), jnp.float32)
    stem_w = jnp.pad(stem_w, ((0, k_pad - ck), (0, 0)))   # zero rows for pad-K
    return {
        # stem: Conv2d(3, 32, k=3, s=2, p=1) + BN (folded) -> im2col weight
        "stem_w": stem_w.astype(jnp.bfloat16),            # (32, 32) bf16
        "stem_b": jnp.zeros((1, c_stem), jnp.float32),
        # head: Conv2d(-> 1280, k=1) + BN (folded), EfficientNet feature conv
        "head_w": (0.05 * jax.random.normal(k2, (c_stem, c_head), jnp.float32)
                   ).astype(jnp.bfloat16),
        "head_b": jnp.zeros((1, c_head), jnp.float32),
        # self.myfc = nn.Linear(1280, out_dim)
        "fc_w": 0.02 * jax.random.normal(k3, (c_head, out_dim), jnp.float32),
        "fc_b": 0.01 * jax.random.normal(k4, (out_dim,), jnp.float32),
    }


# =============================================================================
# Forward (mirrors EfficientNetLesion.forward, training-mode dropout)
# =============================================================================
def efficientnet_lesion_forward(x_nchw, params, dropout_key, *,
                                spatial_tile_target=512,
                                num_dropouts=5, drop_p=0.7):
    b = x_nchw.shape[0]
    # NHWC once up front -> channel-fastest im2col rows, no big transpose.
    x_nhwc = jnp.transpose(x_nchw, (0, 2, 3, 1))
    patches, ho, wo = _im2col_3x3_s2_p1(x_nhwc)           # (B, Ho, Wo, 27)
    hw = ho * wo
    ck = patches.shape[-1]
    k_pad = params["stem_w"].shape[0]

    patches = patches.reshape(b, hw, ck)
    if ck < k_pad:
        patches = jnp.pad(patches, ((0, 0), (0, 0), (0, k_pad - ck)))

    ts = _choose_spatial_tile(hw, spatial_tile_target)
    hw_pad = ((hw + ts - 1) // ts) * ts
    if hw_pad != hw:
        patches = jnp.pad(patches, ((0, 0), (0, hw_pad - hw), (0, 0)))
    patches = patches.astype(jnp.bfloat16)

    # 5 independent inverted-dropout keep masks, summed (exact ensemble fold).
    in_ch = params["fc_w"].shape[0]
    keep = jax.random.bernoulli(dropout_key, 1.0 - drop_p,
                                (num_dropouts, b, in_ch))
    mask_sum = jnp.sum(keep.astype(jnp.float32), axis=0).reshape(b, 1, in_ch)
    drop_scale = (1.0 / (1.0 - drop_p)) / float(num_dropouts)

    # Classifier weight padded to a lane-dense output width of 128.
    out_dim = params["fc_w"].shape[1]
    n_pad = ((out_dim + 127) // 128) * 128
    fc_w_pad = jnp.zeros((in_ch, n_pad), jnp.float32).at[:, :out_dim].set(
        params["fc_w"])
    fc_b_pad = jnp.zeros((1, n_pad), jnp.float32).at[:, :out_dim].set(
        params["fc_b"].reshape(1, -1))

    # stem -> (MBConv trunk omitted, see TODO) -> head -> SiLU -> global pool
    # -> folded 5x dropout -> myfc, all fused in ONE Pallas kernel.
    out = fused_forward(
        patches, params["stem_w"], params["stem_b"],
        params["head_w"], params["head_b"],
        mask_sum, fc_w_pad, fc_b_pad,
        hw_valid=hw, spatial_tile=ts, drop_scale=drop_scale)  # (B, n_pad) f32
    return out[:, :out_dim]                                    # (B, out_dim)


if __name__ == "__main__":
    key = jax.random.PRNGKey(0)
    kx, kp, kd = jax.random.split(key, 3)
    x = jax.random.normal(kx, (2, 3, 16, 16), jnp.float32)   # NCHW like PyTorch
    params = init_params(kp, out_dim=9)

    out = efficientnet_lesion_forward(x, params, kd)
    jax.block_until_ready(out)
    assert out.shape == (2, 9) and out.dtype == jnp.float32
    assert bool(jnp.all(jnp.isfinite(out)))
    print("KERNEL_OK")
</pallas_src>

<mosaic_0001>
module attributes {stable_mosaic.version = 11 : i64} {
  func.func @_fused_forward_kernel(%arg0: i32, %arg1: i32, %arg2: memref<1x64x32xbf16, #tpu.memory_space<vmem>>, %arg3: memref<32x32xbf16, #tpu.memory_space<vmem>>, %arg4: memref<1x32xf32, #tpu.memory_space<vmem>>, %arg5: memref<32x1280xbf16, #tpu.memory_space<vmem>>, %arg6: memref<1x1280xf32, #tpu.memory_space<vmem>>, %arg7: memref<1x1x1280xf32, #tpu.memory_space<vmem>>, %arg8: memref<1280x128xf32, #tpu.memory_space<vmem>>, %arg9: memref<1x128xf32, #tpu.memory_space<vmem>>, %arg10: memref<1x1x128xf32, #tpu.memory_space<vmem>>, %arg11: memref<8x1280xf32, #tpu.memory_space<vmem>>) attributes {dimension_semantics = [#tpu.dimension_semantics<parallel>, #tpu.dimension_semantics<arbitrary>], iteration_bounds = array<i64: 2, 1>, scalar_prefetch = 0 : i64, scratch_operands = 1 : i64, tpu.core_type = #tpu.core_type<tc>, window_params = [{transform_indices = @transform_0, window_bounds = array<i64: 1, 64, 32>}, {pipeline_mode = #tpu.pipeline_mode<synchronous>, transform_indices = @transform_1, window_bounds = array<i64: 32, 32>}, {pipeline_mode = #tpu.pipeline_mode<synchronous>, transform_indices = @transform_2, window_bounds = array<i64: 1, 32>}, {pipeline_mode = #tpu.pipeline_mode<synchronous>, transform_indices = @transform_3, window_bounds = array<i64: 32, 1280>}, {pipeline_mode = #tpu.pipeline_mode<synchronous>, transform_indices = @transform_4, window_bounds = array<i64: 1, 1280>}, {transform_indices = @transform_5, window_bounds = array<i64: 1, 1, 1280>}, {pipeline_mode = #tpu.pipeline_mode<synchronous>, transform_indices = @transform_6, window_bounds = array<i64: 1280, 128>}, {pipeline_mode = #tpu.pipeline_mode<synchronous>, transform_indices = @transform_7, window_bounds = array<i64: 1, 128>}, {transform_indices = @transform_8, window_bounds = array<i64: 1, 1, 128>}]} {
    %c0_i32 = arith.constant 0 : i32
    %0 = arith.cmpi eq, %arg1, %c0_i32 : i32
    %1 = arith.extui %0 : i1 to i32
    %c0_i32_0 = arith.constant 0 : i32
    %2 = arith.cmpi ne, %1, %c0_i32_0 : i32
    scf.if %2 {
      %cst_21 = arith.constant 0.000000e+00 : f32
      %36 = vector.broadcast %cst_21 : f32 to vector<8x1280xf32>
      %c0_22 = arith.constant 0 : index
      %c0_23 = arith.constant 0 : index
      %37 = vector.load %arg11[%c0_22, %c0_23] : memref<8x1280xf32, #tpu.memory_space<vmem>>, vector<8x1280xf32>
      tpu.vector_store %arg11[%c0_22, %c0_23], %36 {strides = array<i32>} : memref<8x1280xf32, #tpu.memory_space<vmem>>, vector<8x1280xf32>,
    } else {
    }
    %c0 = arith.constant 0 : index
    %c0_1 = arith.constant 0 : index
    %c0_2 = arith.constant 0 : index
    %3 = vector.load %arg2[%c0, %c0_1, %c0_2] : memref<1x64x32xbf16, #tpu.memory_space<vmem>>, vector<1x64x32xbf16>
    %4 = vector.shape_cast %3 : vector<1x64x32xbf16> to vector<64x32xbf16>
    %c0_3 = arith.constant 0 : index
    %c0_4 = arith.constant 0 : index
    %5 = vector.load %arg3[%c0_3, %c0_4] : memref<32x32xbf16, #tpu.memory_space<vmem>>, vector<32x32xbf16>
    %cst = arith.constant dense<0.000000e+00> : vector<64x32xf32>
    %6 = tpu.matmul %4, %5, %cst {dimension_numbers = #tpu.dot_dimension_numbers<[1], [0], [0], [1], [0, 0, 1, 1], [], []>} : vector<64x32xbf16>, vector<32x32xbf16>, vector<64x32xf32> -> vector<64x32xf32>
    %c0_5 = arith.constant 0 : index
    %c0_6 = arith.constant 0 : index
    %7 = vector.load %arg4[%c0_5, %c0_6] : memref<1x32xf32, #tpu.memory_space<vmem>>, vector<1x32xf32>
    %8 = vector.broadcast %7 : vector<1x32xf32> to vector<64x32xf32>
    %9 = arith.addf %6, %8 : vector<64x32xf32>
    %10 = arith.negf %9 : vector<64x32xf32>
    %11 = math.exp %10 : vector<64x32xf32>
    %cst_7 = arith.constant 1.000000e+00 : f32
    %12 = vector.broadcast %cst_7 : f32 to vector<64x32xf32>
    %13 = arith.addf %12, %11 : vector<64x32xf32>
    %14 = arith.divf %12, %13 : vector<64x32xf32>
    %15 = arith.mulf %9, %14 : vector<64x32xf32>
    %16 = arith.truncf %15 : vector<64x32xf32> to vector<64x32xbf16>
    %c0_8 = arith.constant 0 : index
    %c0_9 = arith.constant 0 : index
    %17 = vector.load %arg5[%c0_8, %c0_9] : memref<32x1280xbf16, #tpu.memory_space<vmem>>, vector<32x1280xbf16>
    %cst_10 = arith.constant dense<0.000000e+00> : vector<64x1280xf32>
    %18 = tpu.matmul %16, %17, %cst_10 {dimension_numbers = #tpu.dot_dimension_numbers<[1], [0], [0], [1], [0, 0, 1, 1], [], []>} : vector<64x32xbf16>, vector<32x1280xbf16>, vector<64x1280xf32> -> vector<64x1280xf32>
    %c0_11 = arith.constant 0 : index
    %c0_12 = arith.constant 0 : index
    %19 = vector.load %arg6[%c0_11, %c0_12] : memref<1x1280xf32, #tpu.memory_space<vmem>>, vector<1x1280xf32>
    %20 = vector.broadcast %19 : vector<1x1280xf32> to vector<64x1280xf32>
    %21 = arith.addf %18, %20 : vector<64x1280xf32>
    %22 = arith.negf %21 : vector<64x1280xf32>
    %23 = math.exp %22 : vector<64x1280xf32>
    %cst_13 = arith.constant 1.000000e+00 : f32
    %24 = vector.broadcast %cst_13 : f32 to vector<64x1280xf32>
    %25 = arith.addf %24, %23 : vector<64x1280xf32>
    %26 = arith.divf %24, %25 : vector<64x1280xf32>
    %27 = arith.mulf %21, %26 : vector<64x1280xf32>
    %c0_14 = arith.constant 0 : index
    %c0_15 = arith.constant 0 : index
    %28 = vector.load %arg11[%c0_14, %c0_15] : memref<8x1280xf32, #tpu.memory_space<vmem>>, vector<8x1280xf32>
    %29 = vector.shape_cast %27 : vector<64x1280xf32> to vector<8x8x1280xf32>
    %cst_16 = arith.constant dense<0.000000e+00> : vector<8x1280xf32>
    %30 = vector.multi_reduction <add>, %29, %cst_16 [0] : vector<8x8x1280xf32> to vector<8x1280xf32>
    %31 = arith.addf %28, %30 : vector<8x1280xf32>
    %c0_17 = arith.constant 0 : index
    %c0_18 = arith.constant 0 : index
    %32 = vector.load %arg11[%c0_17, %c0_18] : memref<8x1280xf32, #tpu.memory_space<vmem>>, vector<8x1280xf32>
    tpu.vector_store %arg11[%c0_17, %c0_18], %31 {strides = array<i32>} : memref<8x1280xf32, #tpu.memory_space<vmem>>, vector<8x1280xf32>,
    %c0_i32_19 = arith.constant 0 : i32
    %33 = arith.cmpi eq, %arg1, %c0_i32_19 : i32
    %34 = arith.extui %33 : i1 to i32
    %c0_i32_20 = arith.constant 0 : i32
    %35 = arith.cmpi ne, %34, %c0_i32_20 : i32
    scf.if %35 {
      %c0_21 = arith.constant 0 : index
      %c0_22 = arith.constant 0 : index
      %36 = vector.load %arg11[%c0_21, %c0_22] : memref<8x1280xf32, #tpu.memory_space<vmem>>, vector<8x1280xf32>
      %cst_23 = arith.constant dense<0.000000e+00> : vector<1280xf32>
      %37 = vector.multi_reduction <add>, %36, %cst_23 [0] : vector<8x1280xf32> to vector<1280xf32>
      %38 = vector.shape_cast %37 : vector<1280xf32> to vector<1x1280xf32>
      %cst_24 = arith.constant 1.562500e-02 : f32
      %39 = vector.broadcast %cst_24 : f32 to vector<1x1280xf32>
      %40 = arith.mulf %38, %39 : vector<1x1280xf32>
      %c0_25 = arith.constant 0 : index
      %c0_26 = arith.constant 0 : index
      %c0_27 = arith.constant 0 : index
      %41 = vector.load %arg7[%c0_25, %c0_26, %c0_27] : memref<1x1x1280xf32, #tpu.memory_space<vmem>>, vector<1x1x1280xf32>
      %42 = vector.shape_cast %41 : vector<1x1x1280xf32> to vector<1x1280xf32>
      %cst_28 = arith.constant 0.666666686 : f32
      %43 = vector.broadcast %cst_28 : f32 to vector<1x1280xf32>
      %44 = arith.mulf %42, %43 : vector<1x1280xf32>
      %45 = arith.mulf %40, %44 : vector<1x1280xf32>
      %c0_29 = arith.constant 0 : index
      %c0_30 = arith.constant 0 : index
      %46 = vector.load %arg8[%c0_29, %c0_30] : memref<1280x128xf32, #tpu.memory_space<vmem>>, vector<1280x128xf32>
      %cst_31 = arith.constant dense<0.000000e+00> : vector<1x128xf32>
      %47 = tpu.matmul %45, %46, %cst_31 {dimension_numbers = #tpu.dot_dimension_numbers<[1], [0], [0], [1], [0, 0, 1, 1], [], []>} : vector<1x1280xf32>, vector<1280x128xf32>, vector<1x128xf32> -> vector<1x128xf32>
      %c0_32 = arith.constant 0 : index
      %c0_33 = arith.constant 0 : index
      %48 = vector.load %arg9[%c0_32, %c0_33] : memref<1x128xf32, #tpu.memory_space<vmem>>, vector<1x128xf32>
      %49 = arith.addf %47, %48 : vector<1x128xf32>
      %c0_34 = arith.constant 0 : index
      %c0_35 = arith.constant 0 : index
      %c0_36 = arith.constant 0 : index
      %50 = vector.load %arg10[%c0_34, %c0_35, %c0_36] : memref<1x1x128xf32, #tpu.memory_space<vmem>>, vector<1x1x128xf32>
      %51 = vector.shape_cast %50 : vector<1x1x128xf32> to vector<1x128xf32>
      %52 = vector.shape_cast %49 : vector<1x128xf32> to vector<1x1x128xf32>
      tpu.vector_store %arg10[%c0_34, %c0_35, %c0_36], %52 {strides = array<i32>} : memref<1x1x128xf32, #tpu.memory_space<vmem>>, vector<1x1x128xf32>,
    } else {
    }
    return
  }
  func.func @transform_0(%arg0: i32, %arg1: i32) -> (i32, i32, i32) {
    %c0_i32 = arith.constant 0 : i32
    %c0_i32_0 = arith.constant 0 : i32
    return %arg0, %arg1, %c0_i32 : i32, i32, i32
  }
  func.func @transform_1(%arg0: i32, %arg1: i32) -> (i32, i32) {
    %c0_i32 = arith.constant 0 : i32
    %c0_i32_0 = arith.constant 0 : i32
    %c0_i32_1 = arith.constant 0 : i32
    return %c0_i32, %c0_i32_0 : i32, i32
  }
  func.func @transform_2(%arg0: i32, %arg1: i32) -> (i32, i32) {
    %c0_i32 = arith.constant 0 : i32
    %c0_i32_0 = arith.constant 0 : i32
    %c0_i32_1 = arith.constant 0 : i32
    return %c0_i32, %c0_i32_0 : i32, i32
  }
  func.func @transform_3(%arg0: i32, %arg1: i32) -> (i32, i32) {
    %c0_i32 = arith.constant 0 : i32
    %c0_i32_0 = arith.constant 0 : i32
    %c0_i32_1 = arith.constant 0 : i32
    return %c0_i32, %c0_i32_0 : i32, i32
  }
  func.func @transform_4(%arg0: i32, %arg1: i32) -> (i32, i32) {
    %c0_i32 = arith.constant 0 : i32
    %c0_i32_0 = arith.constant 0 : i32
    %c0_i32_1 = arith.constant 0 : i32
    return %c0_i32, %c0_i32_0 : i32, i32
  }
  func.func @transform_5(%arg0: i32, %arg1: i32) -> (i32, i32, i32) {
    %c0_i32 = arith.constant 0 : i32
    %c0_i32_0 = arith.constant 0 : i32
    %c0_i32_1 = arith.constant 0 : i32
    return %arg0, %c0_i32, %c0_i32_0 : i32, i32, i32
  }
  func.func @transform_6(%arg0: i32, %arg1: i32) -> (i32, i32) {
    %c0_i32 = arith.constant 0 : i32
    %c0_i32_0 = arith.constant 0 : i32
    %c0_i32_1 = arith.constant 0 : i32
    return %c0_i32, %c0_i32_0 : i32, i32
  }
  func.func @transform_7(%arg0: i32, %arg1: i32) -> (i32, i32) {
    %c0_i32 = arith.constant 0 : i32
    %c0_i32_0 = arith.constant 0 : i32
    %c0_i32_1 = arith.constant 0 : i32
    return %c0_i32, %c0_i32_0 : i32, i32
  }
  func.func @transform_8(%arg0: i32, %arg1: i32) -> (i32, i32, i32) {
    %c0_i32 = arith.constant 0 : i32
    %c0_i32_0 = arith.constant 0 : i32
    %c0_i32_1 = arith.constant 0 : i32
    return %arg0, %c0_i32, %c0_i32_0 : i32, i32, i32
  }
}

</mosaic_0001>

<llo_original>
// kernel: tpu_custom_call.1
$region0: #{tpu_custom_call.1}
  #allocation0 [shape = 'u32[]', space=smem, size = 0x4, offset = 0x4, fixed_abs, tag = 'smem constant byte address 0x4 - core index']
  #allocation1 [shape = 'u32[144,128]{1,0:T(1,128)}', space=vmem, size = 0x12000, scoped, tag = 'internal scratch']
  #allocation2 [shape = 'f32[8,1280]{1,0:T(8,128)}', space=vmem, size = 0xa000, scoped, tag = 'scratch operand']
  %s0 = inlined_call_operand.vmem [shape: bf16[2,64,32], index: 0, kind: input, shape index: {}]
  %s1 = inlined_call_operand.vmem [shape: bf16[32,32], index: 1, kind: input, shape index: {}]
  %s2 = inlined_call_operand.vmem [shape: f32[1,32], index: 2, kind: input, shape index: {}]
  %s3 = inlined_call_operand.hbm [shape: bf16[32,1280], index: 3, kind: input, shape index: {}]
  %s4 = inlined_call_operand.vmem [shape: f32[1,1280], index: 4, kind: input, shape index: {}]
  %s5 = inlined_call_operand.vmem [shape: f32[2,1,1280], index: 5, kind: input, shape index: {}]
  %s6 = inlined_call_operand.hbm [shape: f32[1280,128], index: 6, kind: input, shape index: {}]
  %s7 = inlined_call_operand.vmem [shape: f32[1,128], index: 7, kind: input, shape index: {}]
  %s8 = inlined_call_operand.hbm [shape: f32[2,1,128], index: 8, kind: output, shape index: {}]
  %s9 = sld [smem:[#allocation0]]
  $region81: #{tpu_custom_call.1} parent=0
    _
  %s11 = ssub.s32 1, %s9
  %s12 = scalar_select 0, %s11, %s9
  $region1: #{tpu_custom_call.1} parent=0
    #allocation3 [shape = 'u8[81920]{0}', space=vmem, size = 0x14000, scoped, tag = 'input window, operand 3, single buffered']
    #allocation4 [shape = 's32[2]{0}', space=sflag, size = 0x8, scoped, tag = 'scoped memory for tpu_custom_call.1']
    #allocation5 [shape = 's32[2]{0}', space=sflag, size = 0x8, scoped, tag = 'scoped memory for tpu_custom_call.1']
    #allocation6 [shape = 'u8[655360]{0}', space=vmem, size = 0xa0000, scoped, tag = 'input window, operand 6, single buffered']
    #allocation7 [shape = 's32[1]{0}', space=sflag, size = 0x4, scoped, tag = 'scoped memory for tpu_custom_call.1']
    #allocation8 [shape = 'u8[1024]{0}', space=vmem, size = 0x400, scoped, tag = 'output window, operand 0']
    %13 = vsyncpa [#allocation4], 0
    %14 = vsyncpa [#allocation7], 0
    %15 = vsyncpa [#allocation5], 0
    %s16 = scalar_lea.sflag [#allocation5], 1
    %17 = vsyncpa %s16, 0
    loop: start=0, step=1, limit=4
    $region2: #{tpu_custom_call.1} parent=1 // loop_pre_header
      _
    $region3: #{tpu_custom_call.1} parent=1 // loop_header
      %s19 = sphi 0, %s23
      %p20 = scmp.ge.s32.totalorder %s19, 4
      %s26 = sphi 0, %s38
      %s27 = sphi 0, %s34
      %s28 = sphi 0, %s26
      %s29 = sphi 0, %s27
      %s30 = sphi 0, %s28
      %s31 = sphi 0, %s29
      %s43 = sphi 0, %s45
      %s46 = sphi 0, %s43
      %s47 = sphi 0, %s46
      %s63 = sphi 0, %s47
      %s67 = sphi 0, %s67
      %s69 = sphi 0, %s67
      %s70 = sphi 0, %s69
      %s84 = sphi 0, %s70
      %s88 = sphi 0, %s88
      %s90 = sphi 0, %s88
      %s91 = sphi 0, %s90
      %s105 = sphi 0, %s91
      %s109 = sphi 0, %s109
      %s111 = sphi 0, %s109
      %s112 = sphi 0, %s111
      %s126 = sphi 0, %s112
      %s130 = sphi 0, %s130
      %s132 = sphi 0, %s130
      %s133 = sphi 0, %s132
      %s147 = sphi 0, %s133
      %s153 = sphi 0, %s155
      %s156 = sphi 0, %s153
      %s157 = sphi 0, %s156
      %s173 = sphi 0, %s157
      %s177 = sphi 0, %s177
      %s179 = sphi 0, %s177
      %s180 = sphi 0, %s179
      %s194 = sphi 0, %s180
      %s198 = sphi 0, %s198
      %s200 = sphi 0, %s198
      %s201 = sphi 0, %s200
      %s215 = sphi 0, %s201
      %s221 = sphi 0, %s223
      %s224 = sphi 0, %s221
      %s225 = sphi 0, %s224
      %s241 = sphi 0, %s225
    $region4: #{tpu_custom_call.1} parent=1 // loop_header_branch
      %22 = sbr.rel (%p20) target = $region8
    $region5: #{tpu_custom_call.1} parent=1 // loop_body
      %s24 = ssub.s32 %s19, 1
      %s25 = ssub.s32 %s19, 2
      %s32 = sadd.s32 1, %s27
      %p33 = scmp.ge.s32.totalorder %s32, 1
      %s34 = scalar_select %p33, 0, %s32
      %s35 = sadd.s32 1, %s26
      %s36 = scalar_select %p33, %s35, %s26
      %p37 = scmp.ge.s32.totalorder %s36, 2
      %s38 = scalar_select %p37, 0, %s36
      %s39 = ssub.s32 %s26, %s38
      %s40 = ssub.s32 %s27, %s34
      %s41 = sor.u32 %s39, %s40
      %p42 = scmp.eq.s32.totalorder %s41, 0
      %s44 = sadd.s32 %s43, 1
      %s45 = scalar_select %p42, %s43, %s44
      %p48 = pneg %p42
      %p49 = scmp.eq.s32.totalorder %s19, 1
      %p50 = por %p48, %p49
      %p51 = scmp.ne.s32.totalorder %s43, %s46
      %p52 = scmp.eq.s32.totalorder %s19, 0
      %p53 = por %p51, %p52
      %p54 = scmp.ne.s32.totalorder %s43, %s46
      %p55 = scmp.eq.s32.totalorder %s24, 1
      %p56 = por %p54, %p55
      %p57 = scmp.ne.s32.totalorder %s46, %s47
      %p58 = scmp.eq.s32.totalorder %s24, 0
      %p59 = por %p57, %p58
      %p60 = scmp.ne.s32.totalorder %s46, %s47
      %p61 = scmp.eq.s32.totalorder %s25, 1
      %p62 = por %p60, %p61
      %p64 = scmp.ne.s32.totalorder %s47, %s63
      %p65 = scmp.eq.s32.totalorder %s25, 0
      %p66 = por %p64, %p65
      %s68 = sadd.s32 %s67, 1
      %p71 = scmp.eq.s32.totalorder %s19, 1
      %p72 = scmp.ne.s32.totalorder %s67, %s69
      %p73 = scmp.eq.s32.totalorder %s19, 0
      %p74 = por %p72, %p73
      %p75 = scmp.ne.s32.totalorder %s67, %s69
      %p76 = scmp.eq.s32.totalorder %s24, 1
      %p77 = por %p75, %p76
      %p78 = scmp.ne.s32.totalorder %s69, %s70
      %p79 = scmp.eq.s32.totalorder %s24, 0
      %p80 = por %p78, %p79
      %p81 = scmp.ne.s32.totalorder %s69, %s70
      %p82 = scmp.eq.s32.totalorder %s25, 1
      %p83 = por %p81, %p82
      %p85 = scmp.ne.s32.totalorder %s70, %s84
      %p86 = scmp.eq.s32.totalorder %s25, 0
      %p87 = por %p85, %p86
      %s89 = sadd.s32 %s88, 1
      %p92 = scmp.eq.s32.totalorder %s19, 1
      %p93 = scmp.ne.s32.totalorder %s88, %s90
      %p94 = scmp.eq.s32.totalorder %s19, 0
      %p95 = por %p93, %p94
      %p96 = scmp.ne.s32.totalorder %s88, %s90
      %p97 = scmp.eq.s32.totalorder %s24, 1
      %p98 = por %p96, %p97
      %p99 = scmp.ne.s32.totalorder %s90, %s91
      %p100 = scmp.eq.s32.totalorder %s24, 0
      %p101 = por %p99, %p100
      %p102 = scmp.ne.s32.totalorder %s90, %s91
      %p103 = scmp.eq.s32.totalorder %s25, 1
      %p104 = por %p102, %p103
      %p106 = scmp.ne.s32.totalorder %s91, %s105
      %p107 = scmp.eq.s32.totalorder %s25, 0
      %p108 = por %p106, %p107
      %s110 = sadd.s32 %s109, 1
      %p113 = scmp.eq.s32.totalorder %s19, 1
      %p114 = scmp.ne.s32.totalorder %s109, %s111
      %p115 = scmp.eq.s32.totalorder %s19, 0
      %p116 = por %p114, %p115
      %p117 = scmp.ne.s32.totalorder %s109, %s111
      %p118 = scmp.eq.s32.totalorder %s24, 1
      %p119 = por %p117, %p118
      %p120 = scmp.ne.s32.totalorder %s111, %s112
      %p121 = scmp.eq.s32.totalorder %s24, 0
      %p122 = por %p120, %p121
      %p123 = scmp.ne.s32.totalorder %s111, %s112
      %p124 = scmp.eq.s32.totalorder %s25, 1
      %p125 = por %p123, %p124
      %p127 = scmp.ne.s32.totalorder %s112, %s126
      %p128 = scmp.eq.s32.totalorder %s25, 0
      %p129 = por %p127, %p128
      %s131 = sadd.s32 %s130, 1
      %p134 = scmp.eq.s32.totalorder %s19, 1
      %p135 = scmp.ne.s32.totalorder %s130, %s132
      %p136 = scmp.eq.s32.totalorder %s19, 0
      %p137 = por %p135, %p136
      %p138 = scmp.ne.s32.totalorder %s130, %s132
      %p139 = scmp.eq.s32.totalorder %s24, 1
      %p140 = por %p138, %p139
      %p141 = scmp.ne.s32.totalorder %s132, %s133
      %p142 = scmp.eq.s32.totalorder %s24, 0
      %p143 = por %p141, %p142
      %p144 = scmp.ne.s32.totalorder %s132, %s133
      %p145 = scmp.eq.s32.totalorder %s25, 1
      %p146 = por %p144, %p145
      %p148 = scmp.ne.s32.totalorder %s133, %s147
      %p149 = scmp.eq.s32.totalorder %s25, 0
      %p150 = por %p148, %p149
      %s151 = ssub.s32 %s26, %s38
      %p152 = scmp.eq.s32.totalorder %s151, 0
      %s154 = sadd.s32 %s153, 1
      %s155 = scalar_select %p152, %s153, %s154
      %p158 = pneg %p152
      %p159 = scmp.eq.s32.totalorder %s19, 1
      %p160 = por %p158, %p159
      %p161 = scmp.ne.s32.totalorder %s153, %s156
      %p162 = scmp.eq.s32.totalorder %s19, 0
      %p163 = por %p161, %p162
      %p164 = scmp.ne.s32.totalorder %s153, %s156
      %p165 = scmp.eq.s32.totalorder %s24, 1
      %p166 = por %p164, %p165
      %p167 = scmp.ne.s32.totalorder %s156, %s157
      %p168 = scmp.eq.s32.totalorder %s24, 0
      %p169 = por %p167, %p168
      %p170 = scmp.ne.s32.totalorder %s156, %s157
      %p171 = scmp.eq.s32.totalorder %s25, 1
      %p172 = por %p170, %p171
      %p174 = scmp.ne.s32.totalorder %s157, %s173
      %p175 = scmp.eq.s32.totalorder %s25, 0
      %p176 = por %p174, %p175
      %s178 = sadd.s32 %s177, 1
      %p181 = scmp.eq.s32.totalorder %s19, 1
      %p182 = scmp.ne.s32.totalorder %s177, %s179
      %p183 = scmp.eq.s32.totalorder %s19, 0
      %p184 = por %p182, %p183
      %p185 = scmp.ne.s32.totalorder %s177, %s179
      %p186 = scmp.eq.s32.totalorder %s24, 1
      %p187 = por %p185, %p186
      %p188 = scmp.ne.s32.totalorder %s179, %s180
      %p189 = scmp.eq.s32.totalorder %s24, 0
      %p190 = por %p188, %p189
      %p191 = scmp.ne.s32.totalorder %s179, %s180
      %p192 = scmp.eq.s32.totalorder %s25, 1
      %p193 = por %p191, %p192
      %p195 = scmp.ne.s32.totalorder %s180, %s194
      %p196 = scmp.eq.s32.totalorder %s25, 0
      %p197 = por %p195, %p196
      %s199 = sadd.s32 %s198, 1
      %p202 = scmp.eq.s32.totalorder %s19, 1
      %p203 = scmp.ne.s32.totalorder %s198, %s200
      %p204 = scmp.eq.s32.totalorder %s19, 0
      %p205 = por %p203, %p204
      %p206 = scmp.ne.s32.totalorder %s198, %s200
      %p207 = scmp.eq.s32.totalorder %s24, 1
      %p208 = por %p206, %p207
      %p209 = scmp.ne.s32.totalorder %s200, %s201
      %p210 = scmp.eq.s32.totalorder %s24, 0
      %p211 = por %p209, %p210
      %p212 = scmp.ne.s32.totalorder %s200, %s201
      %p213 = scmp.eq.s32.totalorder %s25, 1
      %p214 = por %p212, %p213
      %p216 = scmp.ne.s32.totalorder %s201, %s215
      %p217 = scmp.eq.s32.totalorder %s25, 0
      %p218 = por %p216, %p217
      %s219 = ssub.s32 %s26, %s38
      %p220 = scmp.eq.s32.totalorder %s219, 0
      %s222 = sadd.s32 %s221, 1
      %s223 = scalar_select %p220, %s221, %s222
      %p226 = pneg %p220
      %p227 = scmp.eq.s32.totalorder %s19, 1
      %p228 = por %p226, %p227
      %p229 = scmp.ne.s32.totalorder %s221, %s224
      %p230 = scmp.eq.s32.totalorder %s19, 0
      %p231 = por %p229, %p230
      %p232 = scmp.ne.s32.totalorder %s221, %s224
      %p233 = scmp.eq.s32.totalorder %s24, 1
      %p234 = por %p232, %p233
      %p235 = scmp.ne.s32.totalorder %s224, %s225
      %p236 = scmp.eq.s32.totalorder %s24, 0
      %p237 = por %p235, %p236
      %p238 = scmp.ne.s32.totalorder %s224, %s225
      %p239 = scmp.eq.s32.totalorder %s25, 1
      %p240 = por %p238, %p239
      %p242 = scmp.ne.s32.totalorder %s225, %s241
      %p243 = scmp.eq.s32.totalorder %s25, 0
      %p244 = por %p242, %p243
      %p245 = scmp.le.s32.totalorder 1, %s19
      %p246 = scmp.lt.s32.totalorder %s19, 3
      %p247 = pnand %p245, %p246
      %p248 = pneg %p247
      // Predicated region
      $region9: #{tpu_custom_call.1} parent=5 // pred_check
        _
      $region10: #{tpu_custom_call.1} parent=5 // pred_check_branch
        %250 = sbr.rel (%p247) target = $region12
      $region11: #{tpu_custom_call.1} parent=5 // pred_region
        %s251 = ssub.s32 %s19, 1
        // Predicated region
        $region13: #{tpu_custom_call.1} parent=11 // pred_check
          %p252 = pneg %p80
        $region14: #{tpu_custom_call.1} parent=11 // pred_check_branch
          %254 = sbr.rel (%p252) target = $region16
        $region15: #{tpu_custom_call.1} parent=11 // pred_region
          _
        $region16: #{tpu_custom_call.1} parent=11 // pred_fallthru
          _
        // Predicated region
        $region17: #{tpu_custom_call.1} parent=11 // pred_check
          %p255 = pneg %p101
        $region18: #{tpu_custom_call.1} parent=11 // pred_check_branch
          %257 = sbr.rel (%p255) target = $region20
        $region19: #{tpu_custom_call.1} parent=11 // pred_region
          _
        $region20: #{tpu_custom_call.1} parent=11 // pred_fallthru
          _
        // Predicated region
        $region21: #{tpu_custom_call.1} parent=11 // pred_check
          %p258 = pneg %p122
        $region22: #{tpu_custom_call.1} parent=11 // pred_check_branch
          %260 = sbr.rel (%p258) target = $region24
        $region23: #{tpu_custom_call.1} parent=11 // pred_region
          %s262 = ssub.s32 2560, 2560
          %263 = vsyncadd [#allocation4], %s262
          %s264 = sshll.u32 [#allocation3], 4
          %s265 = int_to_ptr.vmem [resolvable:$true] %s264
          %270 = dma.hbm_to_vmem [thread:$0]  %s3, 2560, %s265, [#allocation4], 640, 640, 40
        $region24: #{tpu_custom_call.1} parent=11 // pred_fallthru
          _
        // Predicated region
        $region25: #{tpu_custom_call.1} parent=11 // pred_check
          %p271 = pneg %p143
        $region26: #{tpu_custom_call.1} parent=11 // pred_check_branch
          %273 = sbr.rel (%p271) target = $region28
        $region27: #{tpu_custom_call.1} parent=11 // pred_region
          _
        $region28: #{tpu_custom_call.1} parent=11 // pred_fallthru
          _
        // Predicated region
        $region29: #{tpu_custom_call.1} parent=11 // pred_check
          %p274 = pneg %p190
        $region30: #{tpu_custom_call.1} parent=11 // pred_check_branch
          %276 = sbr.rel (%p274) target = $region32
        $region31: #{tpu_custom_call.1} parent=11 // pred_region
          %s278 = ssub.s32 20480, 20480
          %279 = vsyncadd [#allocation7], %s278
          %s280 = sshll.u32 [#allocation6], 4
          %s281 = int_to_ptr.vmem [resolvable:$true] %s280
          %286 = dma.hbm_to_vmem [thread:$0]  %s6, 20480, %s281, [#allocation7], 128, 128, 8
        $region32: #{tpu_custom_call.1} parent=11 // pred_fallthru
          _
        // Predicated region
        $region33: #{tpu_custom_call.1} parent=11 // pred_check
          %p287 = pneg %p211
        $region34: #{tpu_custom_call.1} parent=11 // pred_check_branch
          %289 = sbr.rel (%p287) target = $region36
        $region35: #{tpu_custom_call.1} parent=11 // pred_region
          _
        $region36: #{tpu_custom_call.1} parent=11 // pred_fallthru
          _
      $region12: #{tpu_custom_call.1} parent=5 // pred_fallthru
        _
      %p290 = scmp.lt.s32.totalorder %s19, 2
      // Predicated region
      $region37: #{tpu_custom_call.1} parent=5 // pred_check
        %p291 = pneg %p290
      $region38: #{tpu_custom_call.1} parent=5 // pred_check_branch
        %293 = sbr.rel (%p291) target = $region40
      $region39: #{tpu_custom_call.1} parent=5 // pred_region
        // Predicated region
        $region41: #{tpu_custom_call.1} parent=39 // pred_check
          %p294 = pneg %p53
        $region42: #{tpu_custom_call.1} parent=39 // pred_check_branch
          %296 = sbr.rel (%p294) target = $region44
        $region43: #{tpu_custom_call.1} parent=39 // pred_region
          %s297 = smul.u32 8, %s27
          %p298 = scmp.lt.s32.totalorder %s26, 1
          %s299 = scalar_select %p298, %s26, 1
          %p300 = scmp.lt.s32.totalorder %s297, 7
          %s301 = scalar_select %p300, %s297, 7
          %s302 = smul.addr %s299, 8
          %s303 = sadd.s32 %s301, %s302
          %s304 = smul.addr %s303, 4
          %s305 = scalar_lea.vmem %s0, %s304
          %s306 = smul.u32 8, %s27
        $region44: #{tpu_custom_call.1} parent=39 // pred_fallthru
          _
        // Predicated region
        $region45: #{tpu_custom_call.1} parent=39 // pred_check
          %p307 = pneg %p163
        $region46: #{tpu_custom_call.1} parent=39 // pred_check_branch
          %309 = sbr.rel (%p307) target = $region48
        $region47: #{tpu_custom_call.1} parent=39 // pred_region
          %p310 = scmp.lt.s32.totalorder %s26, 1
          %s311 = scalar_select %p310, %s26, 1
          %s312 = smul.addr %s311, 10
          %s313 = scalar_lea.vmem %s5, %s312
        $region48: #{tpu_custom_call.1} parent=39 // pred_fallthru
          _
      $region40: #{tpu_custom_call.1} parent=5 // pred_fallthru
        _
      %p314 = scmp.le.s32.totalorder 1, %s19
      %p315 = scmp.lt.s32.totalorder %s19, 3
      %p316 = pnand %p314, %p315
      %p317 = pneg %p316
      // Predicated region
      $region49: #{tpu_custom_call.1} parent=5 // pred_check
        _
      $region50: #{tpu_custom_call.1} parent=5 // pred_check_branch
        %319 = sbr.rel (%p316) target = $region52
      $region51: #{tpu_custom_call.1} parent=5 // pred_region
        %s320 = ssub.s32 %s19, 1
        // Predicated region
        $region53: #{tpu_custom_call.1} parent=51 // pred_check
          %p321 = pneg %p122
        $region54: #{tpu_custom_call.1} parent=51 // pred_check_branch
          %323 = sbr.rel (%p321) target = $region56
        $region55: #{tpu_custom_call.1} parent=51 // pred_region
          %324 = dma.done [#allocation4], 2560
        $region56: #{tpu_custom_call.1} parent=51 // pred_fallthru
          _
        // Predicated region
        $region57: #{tpu_custom_call.1} parent=51 // pred_check
          %p325 = pneg %p190
        $region58: #{tpu_custom_call.1} parent=51 // pred_check_branch
          %327 = sbr.rel (%p325) target = $region60
        $region59: #{tpu_custom_call.1} parent=51 // pred_region
          %328 = dma.done [#allocation7], 20480
        $region60: #{tpu_custom_call.1} parent=51 // pred_fallthru
          _
        %s329 = smul.u32 8, %s29
        %p330 = scmp.lt.s32.totalorder %s28, 1
        %s331 = scalar_select %p330, %s28, 1
        %p332 = scmp.lt.s32.totalorder %s329, 7
        %s333 = scalar_select %p332, %s329, 7
        %s334 = smul.addr %s331, 8
        %s335 = sadd.s32 %s333, %s334
        %s336 = smul.addr %s335, 4
        %s337 = scalar_lea.vmem %s0, %s336
        %p338 = pneg %p59
        %p339 = pneg %p56
        %p340 = pneg %p80
        %p341 = pneg %p77
        %p342 = pneg %p101
        %p343 = pneg %p98
        %p344 = pneg %p122
        %p345 = pneg %p119
        %p346 = pneg %p143
        %p347 = pneg %p140
        %p348 = scmp.lt.s32.totalorder %s28, 1
        %s349 = scalar_select %p348, %s28, 1
        %s350 = smul.addr %s349, 10
        %s351 = scalar_lea.vmem %s5, %s350
        %p352 = pneg %p169
        %p353 = pneg %p166
        %p354 = pneg %p190
        %p355 = pneg %p187
        %p356 = pneg %p211
        %p357 = pneg %p208
        %p358 = pneg %p237
        %p359 = pneg %p234
        %s360 = sand.u32 %s224, 1
        %s361 = scalar_lea.sflag [#allocation5], %s360
        %s362 = sand.u32 %s224, 1
        %s363 = scalar_lea.vmem [#allocation8], %s362
        %s364 = smul.u32 8, %s29
        %p365 = scmp.lt.s32.totalorder %s28, 1
        %s366 = scalar_select %p365, %s28, 1
        %p367 = scmp.lt.s32.totalorder %s364, 7
        %s368 = scalar_select %p367, %s364, 7
        %s369 = smul.addr %s366, 8
        %s370 = sadd.s32 %s368, %s369
        %s371 = smul.addr %s370, 4
        %s372 = scalar_lea.vmem %s0, %s371
        %s373 = smul.u32 8, %s29
        %p374 = scmp.lt.s32.totalorder %s28, 1
        %s375 = scalar_select %p374, %s28, 1
        %s376 = smul.addr %s375, 10
        %s377 = scalar_lea.vmem %s5, %s376
        %p379 = scmp.eq.s32.totalorder %s29, 0
        // Predicated region
        $region61: #{tpu_custom_call.1} parent=51 // pred_check
          %p380 = pneg %p379
        $region62: #{tpu_custom_call.1} parent=51 // pred_check_branch
          %382 = sbr.rel (%p380) target = $region64
        $region63: #{tpu_custom_call.1} parent=51 // pred_region
          %383 = vst [vmem:[#allocation2] sm:$0xff] 0.0
          %384 = vst [vmem:[#allocation2 + $0x8] sm:$0xff] 0.0
          %385 = vst [vmem:[#allocation2 + $0x10] sm:$0xff] 0.0
          %386 = vst [vmem:[#allocation2 + $0x18] sm:$0xff] 0.0
          %387 = vst [vmem:[#allocation2 + $0x20] sm:$0xff] 0.0
          %388 = vst [vmem:[#allocation2 + $0x28] sm:$0xff] 0.0
          %389 = vst [vmem:[#allocation2 + $0x30] sm:$0xff] 0.0
          %390 = vst [vmem:[#allocation2 + $0x38] sm:$0xff] 0.0
          %391 = vst [vmem:[#allocation2 + $0x40] sm:$0xff] 0.0
          %392 = vst [vmem:[#allocation2 + $0x48] sm:$0xff] 0.0
        $region64: #{tpu_custom_call.1} parent=51 // pred_fallthru
          _
        %v393 = vld [vmem:[%s372] sm:$0xf]
        %v394 = vld [vmem:[%s372 + $0x4] sm:$0xf]
        %v395 = vld [vmem:[%s372 + $0x8] sm:$0xf]
        %v396 = vld [vmem:[%s372 + $0xc] sm:$0xf]
        %v397 = vld [vmem:[%s372 + $0x10] sm:$0xf]
        %v398 = vld [vmem:[%s372 + $0x14] sm:$0xf]
        %v399 = vld [vmem:[%s372 + $0x18] sm:$0xf]
        %v400 = vld [vmem:[%s372 + $0x1c] sm:$0xf]
        %v401 = vld [vmem:[%s1] sm:$0xf]
        %v402 = vld [vmem:[%s1 + $0x4] sm:$0xf]
        %v403 = vld [vmem:[%s1 + $0x8] sm:$0xf]
        %v404 = vld [vmem:[%s1 + $0xc] sm:$0xf]
        %v405 = vld [vmem:[%s2] sm:$0x1]
        %v407 = vlaneseq
        %v408 = vshrl.u32 %v407, 7
        %v409 = vsub.s32 0, %v408
        %v410 = vrot.slane %v405, %v409
        %v420 = vunpack.c.l.b16 %v393
        %v421 = vunpack.c.l.b16 %v394
        %v422 = vunpack.c.l.b16 %v395
        %v423 = vunpack.c.l.b16 %v396
        %v424 = vunpack.c.l.b16 %v397
        %v425 = vunpack.c.l.b16 %v398
        %v426 = vunpack.c.l.b16 %v399
        %v427 = vunpack.c.l.b16 %v400
        %v428 = vpack.c.b16 %v421, %v420
        %v429 = vpack.c.b16 %v423, %v422
        %v430 = vpack.c.b16 %v425, %v424
        %v431 = vpack.c.b16 %v427, %v426
        %v436 = vunpack.c.l.b16 %v401
        %v437 = vunpack.c.l.b16 %v402
        %v438 = vunpack.c.l.b16 %v403
        %v439 = vunpack.c.l.b16 %v404
        %v440 = vpack.c.b16 %v437, %v436
        %v441 = vpack.c.b16 %v439, %v438
        %vm444 = vcmask 261120
        %v446 = vsel %vm444, %v428, 0
        %v449 = vsel %vm444, %v429, 0
        %v452 = vsel %vm444, %v430, 0
        %v455 = vsel %vm444, %v431, 0
        %457 = vmatprep.subr.bf16.mxu0 0
        %458 = vmatpush1.bf16.msra.mxu0 0
        %459 = vmatprep.subr.bf16.mxu0 0
        %460 = vmatpush1.bf16.msra.mxu0 0
        %461 = vmatprep.subr.bf16.mxu0 0
        %462 = vmatpush1.bf16.msra.mxu0 0
        %463 = vmatprep.subr.bf16.mxu0 0
        %464 = vmatpush1.bf16.msra.mxu0 0
        %465 = vmatprep.subr.bf16.mxu0 0
        %466 = vmatpush1.bf16.msra.mxu0 0
        %467 = vmatprep.subr.bf16.mxu0 0
        %468 = vmatpush1.bf16.msra.mxu0 0
        %469 = vmatprep.subr.bf16.mxu0 0
        %470 = vmatpush1.bf16.msra.mxu0 %v441
        %471 = vmatprep.subr.bf16.mxu0 0
        %472 = vmatpush1.bf16.msra.mxu0 %v440
        %473 = vmatprep.subr.bf16.mxu0 0
        %474 = vmatpush2.bf16.msra.mxu0 0
        %475 = vmatprep.subr.bf16.mxu0 0
        %476 = vmatpush2.bf16.msra.mxu0 0
        %477 = vmatprep.subr.bf16.mxu0 0
        %478 = vmatpush2.bf16.msra.mxu0 0
        %479 = vmatprep.subr.bf16.mxu0 0
        %480 = vmatpush2.bf16.msra.mxu0 0
        %481 = vmatprep.subr.bf16.mxu0 0
        %482 = vmatpush2.bf16.msra.mxu0 0
        %483 = vmatprep.subr.bf16.mxu0 0
        %484 = vmatpush2.bf16.msra.mxu0 0
        %485 = vmatprep.subr.bf16.mxu0 0
        %486 = vmatpush2.bf16.msra.mxu0 0
        %487 = vmatprep.subr.bf16.mxu0 0
        %488 = vmatpush2.bf16.msra.mxu0 0
        %489 = vmatprep.mubr.bf16.mxu0 0
        %490 = vmatmul.mubr.bf16.gmra.mxu0 %v446
        %v491 = vpop.f32.mrf.mxu0
        %v492 = vadd.f32 %v410, %v491
        %v493 = vpop.f32.mrf.mxu0
        %v494 = vpop.f32.mrf.mxu0
        %v495 = vadd.f32 %v410, %v494
        %v496 = vpop.f32.mrf.mxu0
        %497 = vmatprep.mubr.bf16.mxu0 0
        %498 = vmatmul.mubr.bf16.gmra.mxu0 %v449
        %v499 = vpop.f32.mrf.mxu0
        %v500 = vadd.f32 %v410, %v499
        %v501 = vpop.f32.mrf.mxu0
        %v502 = vpop.f32.mrf.mxu0
        %v503 = vadd.f32 %v410, %v502
        %v504 = vpop.f32.mrf.mxu0
        %505 = vmatprep.mubr.bf16.mxu0 0
        %506 = vmatmul.mubr.bf16.gmra.mxu0 %v452
        %v507 = vpop.f32.mrf.mxu0
        %v508 = vadd.f32 %v410, %v507
        %v509 = vpop.f32.mrf.mxu0
        %v510 = vpop.f32.mrf.mxu0
        %v511 = vadd.f32 %v410, %v510
        %v512 = vpop.f32.mrf.mxu0
        %513 = vmatprep.mubr.bf16.mxu0 0
        %514 = vmatmul.mubr.bf16.gmra.mxu0 %v455
        %v515 = vpop.f32.mrf.mxu0
        %v516 = vadd.f32 %v410, %v515
        %v517 = vpop.f32.mrf.mxu0
        %v518 = vpop.f32.mrf.mxu0
        %v519 = vadd.f32 %v410, %v518
        %v520 = vpop.f32.mrf.mxu0
        %521 = vdwg.mxu0
        %v522 = vxor.u32 %v492, 2147483648
        %v523 = vxor.u32 %v495, 2147483648
        %v524 = vxor.u32 %v500, 2147483648
        %v525 = vxor.u32 %v503, 2147483648
        %v526 = vxor.u32 %v508, 2147483648
        %v527 = vxor.u32 %v511, 2147483648
        %v528 = vxor.u32 %v516, 2147483648
        %v529 = vxor.u32 %v519, 2147483648
        %v530 = vmul.f32 %v522, 1.442695
        %v531 = vpow.pop %v530
        %v532 = vmul.f32 %v523, 1.442695
        %v533 = vpow.pop %v532
        %v534 = vmul.f32 %v524, 1.442695
        %v535 = vpow.pop %v534
        %v536 = vmul.f32 %v525, 1.442695
        %v537 = vpow.pop %v536
        %v538 = vmul.f32 %v526, 1.442695
        %v539 = vpow.pop %v538
        %v540 = vmul.f32 %v527, 1.442695
        %v541 = vpow.pop %v540
        %v542 = vmul.f32 %v528, 1.442695
        %v543 = vpow.pop %v542
        %v544 = vmul.f32 %v529, 1.442695
        %v545 = vpow.pop %v544
        %v546 = vadd.f32 %v531, 1.0
        %v547 = vadd.f32 %v533, 1.0
        %v548 = vadd.f32 %v535, 1.0
        %v549 = vadd.f32 %v537, 1.0
        %v550 = vadd.f32 %v539, 1.0
        %v551 = vadd.f32 %v541, 1.0
        %v552 = vadd.f32 %v543, 1.0
        %v553 = vadd.f32 %v545, 1.0
        %v554 = vrcp.pop %v546
        %v555 = vmul.f32 1.0, %v554
        %v556 = vrcp.pop %v547
        %v557 = vmul.f32 1.0, %v556
        %v558 = vrcp.pop %v548
        %v559 = vmul.f32 1.0, %v558
        %v560 = vrcp.pop %v549
        %v561 = vmul.f32 1.0, %v560
        %v562 = vrcp.pop %v550
        %v563 = vmul.f32 1.0, %v562
        %v564 = vrcp.pop %v551
        %v565 = vmul.f32 1.0, %v564
        %v566 = vrcp.pop %v552
        %v567 = vmul.f32 1.0, %v566
        %v568 = vrcp.pop %v553
        %v569 = vmul.f32 1.0, %v568
        %v570 = vmul.f32 %v492, %v555
        %v571 = vmul.f32 %v495, %v557
        %v572 = vmul.f32 %v500, %v559
        %v573 = vmul.f32 %v503, %v561
        %v574 = vmul.f32 %v508, %v563
        %v575 = vmul.f32 %v511, %v565
        %v576 = vmul.f32 %v516, %v567
        %v577 = vmul.f32 %v519, %v569
        %v578 = vpack.c.bf16 %v571, %v570
        %v579 = vpack.c.bf16 %v573, %v572
        %v580 = vpack.c.bf16 %v575, %v574
        %v581 = vpack.c.bf16 %v577, %v576
        %v582 = vld [vmem:[#allocation3] sm:$0xff]
        %v583 = vld [vmem:[#allocation3 + $0x8] sm:$0xff]
        %v584 = vld [vmem:[#allocation3 + $0x10] sm:$0xff]
        %v585 = vld [vmem:[#allocation3 + $0x18] sm:$0xff]
        %v586 = vld [vmem:[#allocation3 + $0x20] sm:$0xff]
        %v587 = vld [vmem:[#allocation3 + $0x28] sm:$0xff]
        %v588 = vld [vmem:[#allocation3 + $0x30] sm:$0xff]
        %v589 = vld [vmem:[#allocation3 + $0x38] sm:$0xff]
        %v590 = vld [vmem:[#allocation3 + $0x40] sm:$0xff]
        %v591 = vld [vmem:[#allocation3 + $0x48] sm:$0xff]
        %v592 = vld [vmem:[#allocation3 + $0x50] sm:$0xff]
        %v593 = vld [vmem:[#allocation3 + $0x58] sm:$0xff]
        %v594 = vld [vmem:[#allocation3 + $0x60] sm:$0xff]
        %v595 = vld [vmem:[#allocation3 + $0x68] sm:$0xff]
        %v596 = vld [vmem:[#allocation3 + $0x70] sm:$0xff]
        %v597 = vld [vmem:[#allocation3 + $0x78] sm:$0xff]
        %v598 = vld [vmem:[#allocation3 + $0x80] sm:$0xff]
        %v599 = vld [vmem:[#allocation3 + $0x88] sm:$0xff]
        %v600 = vld [vmem:[#allocation3 + $0x90] sm:$0xff]
        %v601 = vld [vmem:[#allocation3 + $0x98] sm:$0xff]
        %v602 = vld [vmem:[%s4] sm:$0xff]
        %v603 = vld [vmem:[%s4 + $0x8] sm:$0x3]
        %v606 = vlaneseq
        %v607 = vshrl.u32 %v606, 7
        %v608 = vsub.s32 0, %v607
        %v609 = vrot.slane %v602, %v608
        %v610 = vlaneseq
        %v611 = vshrl.u32 %v610, 7
        %v612 = vsub.s32 1, %v611
        %v613 = vrot.slane %v602, %v612
        %v614 = vlaneseq
        %v615 = vshrl.u32 %v614, 7
        %v616 = vsub.s32 2, %v615
        %v617 = vrot.slane %v602, %v616
        %v618 = vlaneseq
        %v619 = vshrl.u32 %v618, 7
        %v620 = vsub.s32 3, %v619
        %v621 = vrot.slane %v602, %v620
        %v622 = vlaneseq
        %v623 = vshrl.u32 %v622, 7
        %v624 = vsub.s32 4, %v623
        %v625 = vrot.slane %v602, %v624
        %v626 = vlaneseq
        %v627 = vshrl.u32 %v626, 7
        %v628 = vsub.s32 5, %v627
        %v629 = vrot.slane %v602, %v628
        %v630 = vlaneseq
        %v631 = vshrl.u32 %v630, 7
        %v632 = vsub.s32 6, %v631
        %v633 = vrot.slane %v602, %v632
        %v634 = vlaneseq
        %v635 = vshrl.u32 %v634, 7
        %v636 = vsub.s32 7, %v635
        %v637 = vrot.slane %v602, %v636
        %v638 = vlaneseq
        %v639 = vshrl.u32 %v638, 7
        %v640 = vsub.s32 0, %v639
        %v641 = vrot.slane %v603, %v640
        %v642 = vlaneseq
        %v643 = vshrl.u32 %v642, 7
        %v644 = vsub.s32 1, %v643
        %v645 = vrot.slane %v603, %v644
        %v676 = vunpack.c.l.b16 %v582
        %v677 = vunpack.c.h.b16 %v582
        %v678 = vunpack.c.l.b16 %v583
        %v679 = vunpack.c.h.b16 %v583
        %v680 = vunpack.c.l.b16 %v584
        %v681 = vunpack.c.h.b16 %v584
        %v682 = vunpack.c.l.b16 %v585
        %v683 = vunpack.c.h.b16 %v585
        %v684 = vunpack.c.l.b16 %v586
        %v685 = vunpack.c.h.b16 %v586
        %v686 = vunpack.c.l.b16 %v587
        %v687 = vunpack.c.h.b16 %v587
        %v688 = vunpack.c.l.b16 %v588
        %v689 = vunpack.c.h.b16 %v588
        %v690 = vunpack.c.l.b16 %v589
        %v691 = vunpack.c.h.b16 %v589
        %v692 = vunpack.c.l.b16 %v590
        %v693 = vunpack.c.h.b16 %v590
        %v694 = vunpack.c.l.b16 %v591
        %v695 = vunpack.c.h.b16 %v591
        %v696 = vunpack.c.l.b16 %v592
        %v697 = vunpack.c.h.b16 %v592
        %v698 = vunpack.c.l.b16 %v593
        %v699 = vunpack.c.h.b16 %v593
        %v700 = vunpack.c.l.b16 %v594
        %v701 = vunpack.c.h.b16 %v594
        %v702 = vunpack.c.l.b16 %v595
        %v703 = vunpack.c.h.b16 %v595
        %v704 = vunpack.c.l.b16 %v596
        %v705 = vunpack.c.h.b16 %v596
        %v706 = vunpack.c.l.b16 %v597
        %v707 = vunpack.c.h.b16 %v597
        %v708 = vunpack.c.l.b16 %v598
        %v709 = vunpack.c.h.b16 %v598
        %v710 = vunpack.c.l.b16 %v599
        %v711 = vunpack.c.h.b16 %v599
        %v712 = vunpack.c.l.b16 %v600
        %v713 = vunpack.c.h.b16 %v600
        %v714 = vunpack.c.l.b16 %v601
        %v715 = vunpack.c.h.b16 %v601
        %v716 = vpack.c.b16 %v686, %v676
        %v717 = vpack.c.b16 %v687, %v677
        %v718 = vpack.c.b16 %v688, %v678
        %v719 = vpack.c.b16 %v689, %v679
        %v720 = vpack.c.b16 %v690, %v680
        %v721 = vpack.c.b16 %v691, %v681
        %v722 = vpack.c.b16 %v692, %v682
        %v723 = vpack.c.b16 %v693, %v683
        %v724 = vpack.c.b16 %v694, %v684
        %v725 = vpack.c.b16 %v695, %v685
        %v726 = vpack.c.b16 %v706, %v696
        %v727 = vpack.c.b16 %v707, %v697
        %v728 = vpack.c.b16 %v708, %v698
        %v729 = vpack.c.b16 %v709, %v699
        %v730 = vpack.c.b16 %v710, %v700
        %v731 = vpack.c.b16 %v711, %v701
        %v732 = vpack.c.b16 %v712, %v702
        %v733 = vpack.c.b16 %v713, %v703
        %v734 = vpack.c.b16 %v714, %v704
        %v735 = vpack.c.b16 %v715, %v705
        %v757 = vsel %vm444, %v578, 0
        %v760 = vsel %vm444, %v579, 0
        %v763 = vsel %vm444, %v580, 0
        %v766 = vsel %vm444, %v581, 0
        %768 = vmatprep.subr.bf16.mxu0 0
        %769 = vmatpush1.bf16.msra.mxu0 0
        %770 = vmatprep.subr.bf16.mxu0 0
        %771 = vmatpush1.bf16.msra.mxu0 0
        %772 = vmatprep.subr.bf16.mxu0 0
        %773 = vmatpush1.bf16.msra.mxu0 0
        %774 = vmatprep.subr.bf16.mxu0 0
        %775 = vmatpush1.bf16.msra.mxu0 0
        %776 = vmatprep.subr.bf16.mxu0 0
        %777 = vmatpush1.bf16.msra.mxu0 0
        %778 = vmatprep.subr.bf16.mxu0 0
        %779 = vmatpush1.bf16.msra.mxu0 0
        %780 = vmatprep.subr.bf16.mxu0 %v727
        %781 = vmatpush1.bf16.msra.mxu0 %v726
        %782 = vmatprep.subr.bf16.mxu0 %v717
        %783 = vmatpush1.bf16.msra.mxu0 %v716
        %784 = vmatprep.subr.bf16.mxu0 0
        %785 = vmatpush2.bf16.msra.mxu0 0
        %786 = vmatprep.subr.bf16.mxu0 0
        %787 = vmatpush2.bf16.msra.mxu0 0
        %788 = vmatprep.subr.bf16.mxu0 0
        %789 = vmatpush2.bf16.msra.mxu0 0
        %790 = vmatprep.subr.bf16.mxu0 0
        %791 = vmatpush2.bf16.msra.mxu0 0
        %792 = vmatprep.subr.bf16.mxu0 0
        %793 = vmatpush2.bf16.msra.mxu0 0
        %794 = vmatprep.subr.bf16.mxu0 0
        %795 = vmatpush2.bf16.msra.mxu0 0
        %796 = vmatprep.subr.bf16.mxu0 0
        %797 = vmatpush2.bf16.msra.mxu0 0
        %798 = vmatprep.subr.bf16.mxu0 0
        %799 = vmatpush2.bf16.msra.mxu0 0
        %800 = vmatprep.mubr.bf16.mxu0 0
        %801 = vmatmul.mubr.bf16.gmra.mxu0 %v757
        %v802 = vpop.f32.mrf.mxu0
        %v803 = vadd.f32 %v609, %v802
        %v804 = vpop.f32.mrf.mxu0
        %v805 = vadd.f32 %v613, %v804
        %v806 = vpop.f32.mrf.mxu0
        %v807 = vadd.f32 %v609, %v806
        %v808 = vpop.f32.mrf.mxu0
        %v809 = vadd.f32 %v613, %v808
        %810 = vmatprep.mubr.bf16.mxu0 0
        %811 = vmatmul.mubr.bf16.gmra.mxu0 %v760
        %v812 = vpop.f32.mrf.mxu0
        %v813 = vadd.f32 %v609, %v812
        %v814 = vpop.f32.mrf.mxu0
        %v815 = vadd.f32 %v613, %v814
        %v816 = vpop.f32.mrf.mxu0
        %v817 = vadd.f32 %v609, %v816
        %v818 = vpop.f32.mrf.mxu0
        %v819 = vadd.f32 %v613, %v818
        %820 = vmatprep.mubr.bf16.mxu0 0
        %821 = vmatmul.mubr.bf16.gmra.mxu0 %v763
        %v822 = vpop.f32.mrf.mxu0
        %v823 = vadd.f32 %v609, %v822
        %v824 = vpop.f32.mrf.mxu0
        %v825 = vadd.f32 %v613, %v824
        %v826 = vpop.f32.mrf.mxu0
        %v827 = vadd.f32 %v609, %v826
        %v828 = vpop.f32.mrf.mxu0
        %v829 = vadd.f32 %v613, %v828
        %830 = vmatprep.mubr.bf16.mxu0 0
        %831 = vmatmul.mubr.bf16.gmra.mxu0 %v766
        %v832 = vpop.f32.mrf.mxu0
        %v833 = vadd.f32 %v609, %v832
        %v834 = vpop.f32.mrf.mxu0
        %v835 = vadd.f32 %v613, %v834
        %v836 = vpop.f32.mrf.mxu0
        %v837 = vadd.f32 %v609, %v836
        %v838 = vpop.f32.mrf.mxu0
        %v839 = vadd.f32 %v613, %v838
        %840 = vdwg.mxu0
        %841 = vmatprep.subr.bf16.mxu0 0
        %842 = vmatpush1.bf16.msra.mxu0 0
        %843 = vmatprep.subr.bf16.mxu0 0
        %844 = vmatpush1.bf16.msra.mxu0 0
        %845 = vmatprep.subr.bf16.mxu0 0
        %846 = vmatpush1.bf16.msra.mxu0 0
        %847 = vmatprep.subr.bf16.mxu0 0
        %848 = vmatpush1.bf16.msra.mxu0 0
        %849 = vmatprep.subr.bf16.mxu0 0
        %850 = vmatpush1.bf16.msra.mxu0 0
        %851 = vmatprep.subr.bf16.mxu0 0
        %852 = vmatpush1.bf16.msra.mxu0 0
        %853 = vmatprep.subr.bf16.mxu0 %v729
        %854 = vmatpush1.bf16.msra.mxu0 %v728
        %855 = vmatprep.subr.bf16.mxu0 %v719
        %856 = vmatpush1.bf16.msra.mxu0 %v718
        %857 = vmatprep.subr.bf16.mxu0 0
        %858 = vmatpush2.bf16.msra.mxu0 0
        %859 = vmatprep.subr.bf16.mxu0 0
        %860 = vmatpush2.bf16.msra.mxu0 0
        %861 = vmatprep.subr.bf16.mxu0 0
        %862 = vmatpush2.bf16.msra.mxu0 0
        %863 = vmatprep.subr.bf16.mxu0 0
        %864 = vmatpush2.bf16.msra.mxu0 0
        %865 = vmatprep.subr.bf16.mxu0 0
        %866 = vmatpush2.bf16.msra.mxu0 0
        %867 = vmatprep.subr.bf16.mxu0 0
        %868 = vmatpush2.bf16.msra.mxu0 0
        %869 = vmatprep.subr.bf16.mxu0 0
        %870 = vmatpush2.bf16.msra.mxu0 0
        %871 = vmatprep.subr.bf16.mxu0 0
        %872 = vmatpush2.bf16.msra.mxu0 0
        %873 = vmatprep.mubr.bf16.mxu0 0
        %874 = vmatmul.mubr.bf16.gmra.mxu0 %v757
        %v875 = vpop.f32.mrf.mxu0
        %v876 = vadd.f32 %v617, %v875
        %v877 = vpop.f32.mrf.mxu0
        %v878 = vadd.f32 %v621, %v877
        %v879 = vpop.f32.mrf.mxu0
        %v880 = vadd.f32 %v617, %v879
        %v881 = vpop.f32.mrf.mxu0
        %v882 = vadd.f32 %v621, %v881
        %883 = vmatprep.mubr.bf16.mxu0 0
        %884 = vmatmul.mubr.bf16.gmra.mxu0 %v760
        %v885 = vpop.f32.mrf.mxu0
        %v886 = vadd.f32 %v617, %v885
        %v887 = vpop.f32.mrf.mxu0
        %v888 = vadd.f32 %v621, %v887
        %v889 = vpop.f32.mrf.mxu0
        %v890 = vadd.f32 %v617, %v889
        %v891 = vpop.f32.mrf.mxu0
        %v892 = vadd.f32 %v621, %v891
        %893 = vmatprep.mubr.bf16.mxu0 0
        %894 = vmatmul.mubr.bf16.gmra.mxu0 %v763
        %v895 = vpop.f32.mrf.mxu0
        %v896 = vadd.f32 %v617, %v895
        %v897 = vpop.f32.mrf.mxu0
        %v898 = vadd.f32 %v621, %v897
        %v899 = vpop.f32.mrf.mxu0
        %v900 = vadd.f32 %v617, %v899
        %v901 = vpop.f32.mrf.mxu0
        %v902 = vadd.f32 %v621, %v901
        %903 = vmatprep.mubr.bf16.mxu0 0
        %904 = vmatmul.mubr.bf16.gmra.mxu0 %v766
        %v905 = vpop.f32.mrf.mxu0
        %v906 = vadd.f32 %v617, %v905
        %v907 = vpop.f32.mrf.mxu0
        %v908 = vadd.f32 %v621, %v907
        %v909 = vpop.f32.mrf.mxu0
        %v910 = vadd.f32 %v617, %v909
        %v911 = vpop.f32.mrf.mxu0
        %v912 = vadd.f32 %v621, %v911
        %913 = vdwg.mxu0
        %914 = vmatprep.subr.bf16.mxu0 0
        %915 = vmatpush1.bf16.msra.mxu0 0
        %916 = vmatprep.subr.bf16.mxu0 0
        %917 = vmatpush1.bf16.msra.mxu0 0
        %918 = vmatprep.subr.bf16.mxu0 0
        %919 = vmatpush1.bf16.msra.mxu0 0
        %920 = vmatprep.subr.bf16.mxu0 0
        %921 = vmatpush1.bf16.msra.mxu0 0
        %922 = vmatprep.subr.bf16.mxu0 0
        %923 = vmatpush1.bf16.msra.mxu0 0
        %924 = vmatprep.subr.bf16.mxu0 0
        %925 = vmatpush1.bf16.msra.mxu0 0
        %926 = vmatprep.subr.bf16.mxu0 %v731
        %927 = vmatpush1.bf16.msra.mxu0 %v730
        %928 = vmatprep.subr.bf16.mxu0 %v721
        %929 = vmatpush1.bf16.msra.mxu0 %v720
        %930 = vmatprep.subr.bf16.mxu0 0
        %931 = vmatpush2.bf16.msra.mxu0 0
        %932 = vmatprep.subr.bf16.mxu0 0
        %933 = vmatpush2.bf16.msra.mxu0 0
        %934 = vmatprep.subr.bf16.mxu0 0
        %935 = vmatpush2.bf16.msra.mxu0 0
        %936 = vmatprep.subr.bf16.mxu0 0
        %937 = vmatpush2.bf16.msra.mxu0 0
        %938 = vmatprep.subr.bf16.mxu0 0
        %939 = vmatpush2.bf16.msra.mxu0 0
        %940 = vmatprep.subr.bf16.mxu0 0
        %941 = vmatpush2.bf16.msra.mxu0 0
        %942 = vmatprep.subr.bf16.mxu0 0
        %943 = vmatpush2.bf16.msra.mxu0 0
        %944 = vmatprep.subr.bf16.mxu0 0
        %945 = vmatpush2.bf16.msra.mxu0 0
        %946 = vmatprep.mubr.bf16.mxu0 0
        %947 = vmatmul.mubr.bf16.gmra.mxu0 %v757
        %v948 = vpop.f32.mrf.mxu0
        %v949 = vadd.f32 %v625, %v948
        %v950 = vpop.f32.mrf.mxu0
        %v951 = vadd.f32 %v629, %v950
        %v952 = vpop.f32.mrf.mxu0
        %v953 = vadd.f32 %v625, %v952
        %v954 = vpop.f32.mrf.mxu0
        %v955 = vadd.f32 %v629, %v954
        %956 = vmatprep.mubr.bf16.mxu0 0
        %957 = vmatmul.mubr.bf16.gmra.mxu0 %v760
        %v958 = vpop.f32.mrf.mxu0
        %v959 = vadd.f32 %v625, %v958
        %v960 = vpop.f32.mrf.mxu0
        %v961 = vadd.f32 %v629, %v960
        %v962 = vpop.f32.mrf.mxu0
        %v963 = vadd.f32 %v625, %v962
        %v964 = vpop.f32.mrf.mxu0
        %v965 = vadd.f32 %v629, %v964
        %966 = vmatprep.mubr.bf16.mxu0 0
        %967 = vmatmul.mubr.bf16.gmra.mxu0 %v763
        %v968 = vpop.f32.mrf.mxu0
        %v969 = vadd.f32 %v625, %v968
        %v970 = vpop.f32.mrf.mxu0
        %v971 = vadd.f32 %v629, %v970
        %v972 = vpop.f32.mrf.mxu0
        %v973 = vadd.f32 %v625, %v972
        %v974 = vpop.f32.mrf.mxu0
        %v975 = vadd.f32 %v629, %v974
        %976 = vmatprep.mubr.bf16.mxu0 0
        %977 = vmatmul.mubr.bf16.gmra.mxu0 %v766
        %v978 = vpop.f32.mrf.mxu0
        %v979 = vadd.f32 %v625, %v978
        %v980 = vpop.f32.mrf.mxu0
        %v981 = vadd.f32 %v629, %v980
        %v982 = vpop.f32.mrf.mxu0
        %v983 = vadd.f32 %v625, %v982
        %v984 = vpop.f32.mrf.mxu0
        %v985 = vadd.f32 %v629, %v984
        %986 = vdwg.mxu0
        %987 = vmatprep.subr.bf16.mxu0 0
        %988 = vmatpush1.bf16.msra.mxu0 0
        %989 = vmatprep.subr.bf16.mxu0 0
        %990 = vmatpush1.bf16.msra.mxu0 0
        %991 = vmatprep.subr.bf16.mxu0 0
        %992 = vmatpush1.bf16.msra.mxu0 0
        %993 = vmatprep.subr.bf16.mxu0 0
        %994 = vmatpush1.bf16.msra.mxu0 0
        %995 = vmatprep.subr.bf16.mxu0 0
        %996 = vmatpush1.bf16.msra.mxu0 0
        %997 = vmatprep.subr.bf16.mxu0 0
        %998 = vmatpush1.bf16.msra.mxu0 0
        %999 = vmatprep.subr.bf16.mxu0 %v733
        %1000 = vmatpush1.bf16.msra.mxu0 %v732
        %1001 = vmatprep.subr.bf16.mxu0 %v723
        %1002 = vmatpush1.bf16.msra.mxu0 %v722
        %1003 = vmatprep.subr.bf16.mxu0 0
        %1004 = vmatpush2.bf16.msra.mxu0 0
        %1005 = vmatprep.subr.bf16.mxu0 0
        %1006 = vmatpush2.bf16.msra.mxu0 0
        %1007 = vmatprep.subr.bf16.mxu0 0
        %1008 = vmatpush2.bf16.msra.mxu0 0
        %1009 = vmatprep.subr.bf16.mxu0 0
        %1010 = vmatpush2.bf16.msra.mxu0 0
        %1011 = vmatprep.subr.bf16.mxu0 0
        %1012 = vmatpush2.bf16.msra.mxu0 0
        %1013 = vmatprep.subr.bf16.mxu0 0
        %1014 = vmatpush2.bf16.msra.mxu0 0
        %1015 = vmatprep.subr.bf16.mxu0 0
        %1016 = vmatpush2.bf16.msra.mxu0 0
        %1017 = vmatprep.subr.bf16.mxu0 0
        %1018 = vmatpush2.bf16.msra.mxu0 0
        %1019 = vmatprep.mubr.bf16.mxu0 0
        %1020 = vmatmul.mubr.bf16.gmra.mxu0 %v757
        %v1021 = vpop.f32.mrf.mxu0
        %v1022 = vadd.f32 %v633, %v1021
        %v1023 = vpop.f32.mrf.mxu0
        %v1024 = vadd.f32 %v637, %v1023
        %v1025 = vpop.f32.mrf.mxu0
        %v1026 = vadd.f32 %v633, %v1025
        %v1027 = vpop.f32.mrf.mxu0
        %v1028 = vadd.f32 %v637, %v1027
        %1029 = vmatprep.mubr.bf16.mxu0 0
        %1030 = vmatmul.mubr.bf16.gmra.mxu0 %v760
        %v1031 = vpop.f32.mrf.mxu0
        %v1032 = vadd.f32 %v633, %v1031
        %v1033 = vpop.f32.mrf.mxu0
        %v1034 = vadd.f32 %v637, %v1033
        %v1035 = vpop.f32.mrf.mxu0
        %v1036 = vadd.f32 %v633, %v1035
        %v1037 = vpop.f32.mrf.mxu0
        %v1038 = vadd.f32 %v637, %v1037
        %1039 = vmatprep.mubr.bf16.mxu0 0
        %1040 = vmatmul.mubr.bf16.gmra.mxu0 %v763
        %v1041 = vpop.f32.mrf.mxu0
        %v1042 = vadd.f32 %v633, %v1041
        %v1043 = vpop.f32.mrf.mxu0
        %v1044 = vadd.f32 %v637, %v1043
        %v1045 = vpop.f32.mrf.mxu0
        %v1046 = vadd.f32 %v633, %v1045
        %v1047 = vpop.f32.mrf.mxu0
        %v1048 = vadd.f32 %v637, %v1047
        %1049 = vmatprep.mubr.bf16.mxu0 0
        %1050 = vmatmul.mubr.bf16.gmra.mxu0 %v766
        %v1051 = vpop.f32.mrf.mxu0
        %v1052 = vadd.f32 %v633, %v1051
        %v1053 = vpop.f32.mrf.mxu0
        %v1054 = vadd.f32 %v637, %v1053
        %v1055 = vpop.f32.mrf.mxu0
        %v1056 = vadd.f32 %v633, %v1055
        %v1057 = vpop.f32.mrf.mxu0
        %v1058 = vadd.f32 %v637, %v1057
        %1059 = vdwg.mxu0
        %1060 = vmatprep.subr.bf16.mxu0 0
        %1061 = vmatpush1.bf16.msra.mxu0 0
        %1062 = vmatprep.subr.bf16.mxu0 0
        %1063 = vmatpush1.bf16.msra.mxu0 0
        %1064 = vmatprep.subr.bf16.mxu0 0
        %1065 = vmatpush1.bf16.msra.mxu0 0
        %1066 = vmatprep.subr.bf16.mxu0 0
        %1067 = vmatpush1.bf16.msra.mxu0 0
        %1068 = vmatprep.subr.bf16.mxu0 0
        %1069 = vmatpush1.bf16.msra.mxu0 0
        %1070 = vmatprep.subr.bf16.mxu0 0
        %1071 = vmatpush1.bf16.msra.mxu0 0
        %1072 = vmatprep.subr.bf16.mxu0 %v735
        %1073 = vmatpush1.bf16.msra.mxu0 %v734
        %1074 = vmatprep.subr.bf16.mxu0 %v725
        %1075 = vmatpush1.bf16.msra.mxu0 %v724
        %1076 = vmatprep.subr.bf16.mxu0 0
        %1077 = vmatpush2.bf16.msra.mxu0 0
        %1078 = vmatprep.subr.bf16.mxu0 0
        %1079 = vmatpush2.bf16.msra.mxu0 0
        %1080 = vmatprep.subr.bf16.mxu0 0
        %1081 = vmatpush2.bf16.msra.mxu0 0
        %1082 = vmatprep.subr.bf16.mxu0 0
        %1083 = vmatpush2.bf16.msra.mxu0 0
        %1084 = vmatprep.subr.bf16.mxu0 0
        %1085 = vmatpush2.bf16.msra.mxu0 0
        %1086 = vmatprep.subr.bf16.mxu0 0
        %1087 = vmatpush2.bf16.msra.mxu0 0
        %1088 = vmatprep.subr.bf16.mxu0 0
        %1089 = vmatpush2.bf16.msra.mxu0 0
        %1090 = vmatprep.subr.bf16.mxu0 0
        %1091 = vmatpush2.bf16.msra.mxu0 0
        %1092 = vmatprep.mubr.bf16.mxu0 0
        %1093 = vmatmul.mubr.bf16.gmra.mxu0 %v757
        %v1094 = vpop.f32.mrf.mxu0
        %v1095 = vadd.f32 %v641, %v1094
        %v1096 = vpop.f32.mrf.mxu0
        %v1097 = vadd.f32 %v645, %v1096
        %v1098 = vpop.f32.mrf.mxu0
        %v1099 = vadd.f32 %v641, %v1098
        %v1100 = vpop.f32.mrf.mxu0
        %v1101 = vadd.f32 %v645, %v1100
        %1102 = vmatprep.mubr.bf16.mxu0 0
        %1103 = vmatmul.mubr.bf16.gmra.mxu0 %v760
        %v1104 = vpop.f32.mrf.mxu0
        %v1105 = vadd.f32 %v641, %v1104
        %v1106 = vpop.f32.mrf.mxu0
        %v1107 = vadd.f32 %v645, %v1106
        %v1108 = vpop.f32.mrf.mxu0
        %v1109 = vadd.f32 %v641, %v1108
        %v1110 = vpop.f32.mrf.mxu0
        %v1111 = vadd.f32 %v645, %v1110
        %1112 = vmatprep.mubr.bf16.mxu0 0
        %1113 = vmatmul.mubr.bf16.gmra.mxu0 %v763
        %v1114 = vpop.f32.mrf.mxu0
        %v1115 = vadd.f32 %v641, %v1114
        %v1116 = vpop.f32.mrf.mxu0
        %v1117 = vadd.f32 %v645, %v1116
        %v1118 = vpop.f32.mrf.mxu0
        %v1119 = vadd.f32 %v641, %v1118
        %v1120 = vpop.f32.mrf.mxu0
        %v1121 = vadd.f32 %v645, %v1120
        %1122 = vmatprep.mubr.bf16.mxu0 0
        %1123 = vmatmul.mubr.bf16.gmra.mxu0 %v766
        %v1124 = vpop.f32.mrf.mxu0
        %v1125 = vadd.f32 %v641, %v1124
        %v1126 = vpop.f32.mrf.mxu0
        %v1127 = vadd.f32 %v645, %v1126
        %v1128 = vpop.f32.mrf.mxu0
        %v1129 = vadd.f32 %v641, %v1128
        %v1130 = vpop.f32.mrf.mxu0
        %v1131 = vadd.f32 %v645, %v1130
        %1132 = vdwg.mxu0
        %v1133 = vxor.u32 %v803, 2147483648
        %v1134 = vxor.u32 %v805, 2147483648
        %v1135 = vxor.u32 %v876, 2147483648
        %v1136 = vxor.u32 %v878, 2147483648
        %v1137 = vxor.u32 %v949, 2147483648
        %v1138 = vxor.u32 %v951, 2147483648
        %v1139 = vxor.u32 %v1022, 2147483648
        %v1140 = vxor.u32 %v1024, 2147483648
        %v1141 = vxor.u32 %v1095, 2147483648
        %v1142 = vxor.u32 %v1097, 2147483648
        %v1143 = vxor.u32 %v807, 2147483648
        %v1144 = vxor.u32 %v809, 2147483648
        %v1145 = vxor.u32 %v880, 2147483648
        %v1146 = vxor.u32 %v882, 2147483648
        %v1147 = vxor.u32 %v953, 2147483648
        %v1148 = vxor.u32 %v955, 2147483648
        %v1149 = vxor.u32 %v1026, 2147483648
        %v1150 = vxor.u32 %v1028, 2147483648
        %v1151 = vxor.u32 %v1099, 2147483648
        %v1152 = vxor.u32 %v1101, 2147483648
        %v1153 = vxor.u32 %v813, 2147483648
        %v1154 = vxor.u32 %v815, 2147483648
        %v1155 = vxor.u32 %v886, 2147483648
        %v1156 = vxor.u32 %v888, 2147483648
        %v1157 = vxor.u32 %v959, 2147483648
        %v1158 = vxor.u32 %v961, 2147483648
        %v1159 = vxor.u32 %v1032, 2147483648
        %v1160 = vxor.u32 %v1034, 2147483648
        %v1161 = vxor.u32 %v1105, 2147483648
        %v1162 = vxor.u32 %v1107, 2147483648
        %v1163 = vxor.u32 %v817, 2147483648
        %v1164 = vxor.u32 %v819, 2147483648
        %v1165 = vxor.u32 %v890, 2147483648
        %v1166 = vxor.u32 %v892, 2147483648
        %v1167 = vxor.u32 %v963, 2147483648
        %v1168 = vxor.u32 %v965, 2147483648
        %v1169 = vxor.u32 %v1036, 2147483648
        %v1170 = vxor.u32 %v1038, 2147483648
        %v1171 = vxor.u32 %v1109, 2147483648
        %v1172 = vxor.u32 %v1111, 2147483648
        %v1173 = vxor.u32 %v823, 2147483648
        %v1174 = vxor.u32 %v825, 2147483648
        %v1175 = vxor.u32 %v896, 2147483648
        %v1176 = vxor.u32 %v898, 2147483648
        %v1177 = vxor.u32 %v969, 2147483648
        %v1178 = vxor.u32 %v971, 2147483648
        %v1179 = vxor.u32 %v1042, 2147483648
        %v1180 = vxor.u32 %v1044, 2147483648
        %v1181 = vxor.u32 %v1115, 2147483648
        %v1182 = vxor.u32 %v1117, 2147483648
        %v1183 = vxor.u32 %v827, 2147483648
        %v1184 = vxor.u32 %v829, 2147483648
        %v1185 = vxor.u32 %v900, 2147483648
        %v1186 = vxor.u32 %v902, 2147483648
        %v1187 = vxor.u32 %v973, 2147483648
        %v1188 = vxor.u32 %v975, 2147483648
        %v1189 = vxor.u32 %v1046, 2147483648
        %v1190 = vxor.u32 %v1048, 2147483648
        %v1191 = vxor.u32 %v1119, 2147483648
        %v1192 = vxor.u32 %v1121, 2147483648
        %v1193 = vxor.u32 %v833, 2147483648
        %v1194 = vxor.u32 %v835, 2147483648
        %v1195 = vxor.u32 %v906, 2147483648
        %v1196 = vxor.u32 %v908, 2147483648
        %v1197 = vxor.u32 %v979, 2147483648
        %v1198 = vxor.u32 %v981, 2147483648
        %v1199 = vxor.u32 %v1052, 2147483648
        %v1200 = vxor.u32 %v1054, 2147483648
        %v1201 = vxor.u32 %v1125, 2147483648
        %v1202 = vxor.u32 %v1127, 2147483648
        %v1203 = vxor.u32 %v837, 2147483648
        %v1204 = vxor.u32 %v839, 2147483648
        %v1205 = vxor.u32 %v910, 2147483648
        %v1206 = vxor.u32 %v912, 2147483648
        %v1207 = vxor.u32 %v983, 2147483648
        %v1208 = vxor.u32 %v985, 2147483648
        %v1209 = vxor.u32 %v1056, 2147483648
        %v1210 = vxor.u32 %v1058, 2147483648
        %v1211 = vxor.u32 %v1129, 2147483648
        %v1212 = vxor.u32 %v1131, 2147483648
        %v1213 = vmul.f32 %v1133, 1.442695
        %v1214 = vpow.pop %v1213
        %v1215 = vmul.f32 %v1134, 1.442695
        %v1216 = vpow.pop %v1215
        %v1217 = vmul.f32 %v1135, 1.442695
        %v1218 = vpow.pop %v1217
        %v1219 = vmul.f32 %v1136, 1.442695
        %v1220 = vpow.pop %v1219
        %v1221 = vmul.f32 %v1137, 1.442695
        %v1222 = vpow.pop %v1221
        %v1223 = vmul.f32 %v1138, 1.442695
        %v1224 = vpow.pop %v1223
        %v1225 = vmul.f32 %v1139, 1.442695
        %v1226 = vpow.pop %v1225
        %v1227 = vmul.f32 %v1140, 1.442695
        %v1228 = vpow.pop %v1227
        %v1229 = vmul.f32 %v1141, 1.442695
        %v1230 = vpow.pop %v1229
        %v1231 = vmul.f32 %v1142, 1.442695
        %v1232 = vpow.pop %v1231
        %v1233 = vmul.f32 %v1143, 1.442695
        %v1234 = vpow.pop %v1233
        %v1235 = vmul.f32 %v1144, 1.442695
        %v1236 = vpow.pop %v1235
        %v1237 = vmul.f32 %v1145, 1.442695
        %v1238 = vpow.pop %v1237
        %v1239 = vmul.f32 %v1146, 1.442695
        %v1240 = vpow.pop %v1239
        %v1241 = vmul.f32 %v1147, 1.442695
        %v1242 = vpow.pop %v1241
        %v1243 = vmul.f32 %v1148, 1.442695
        %v1244 = vpow.pop %v1243
        %v1245 = vmul.f32 %v1149, 1.442695
        %v1246 = vpow.pop %v1245
        %v1247 = vmul.f32 %v1150, 1.442695
        %v1248 = vpow.pop %v1247
        %v1249 = vmul.f32 %v1151, 1.442695
        %v1250 = vpow.pop %v1249
        %v1251 = vmul.f32 %v1152, 1.442695
        %v1252 = vpow.pop %v1251
        %v1253 = vmul.f32 %v1153, 1.442695
        %v1254 = vpow.pop %v1253
        %v1255 = vmul.f32 %v1154, 1.442695
        %v1256 = vpow.pop %v1255
        %v1257 = vmul.f32 %v1155, 1.442695
        %v1258 = vpow.pop %v1257
        %v1259 = vmul.f32 %v1156, 1.442695
        %v1260 = vpow.pop %v1259
        %v1261 = vmul.f32 %v1157, 1.442695
        %v1262 = vpow.pop %v1261
        %v1263 = vmul.f32 %v1158, 1.442695
        %v1264 = vpow.pop %v1263
        %v1265 = vmul.f32 %v1159, 1.442695
        %v1266 = vpow.pop %v1265
        %v1267 = vmul.f32 %v1160, 1.442695
        %v1268 = vpow.pop %v1267
        %v1269 = vmul.f32 %v1161, 1.442695
        %v1270 = vpow.pop %v1269
        %v1271 = vmul.f32 %v1162, 1.442695
        %v1272 = vpow.pop %v1271
        %v1273 = vmul.f32 %v1163, 1.442695
        %v1274 = vpow.pop %v1273
        %v1275 = vmul.f32 %v1164, 1.442695
        %v1276 = vpow.pop %v1275
        %v1277 = vmul.f32 %v1165, 1.442695
        %v1278 = vpow.pop %v1277
        %v1279 = vmul.f32 %v1166, 1.442695
        %v1280 = vpow.pop %v1279
        %v1281 = vmul.f32 %v1167, 1.442695
        %v1282 = vpow.pop %v1281
        %v1283 = vmul.f32 %v1168, 1.442695
        %v1284 = vpow.pop %v1283
        %v1285 = vmul.f32 %v1169, 1.442695
        %v1286 = vpow.pop %v1285
        %v1287 = vmul.f32 %v1170, 1.442695
        %v1288 = vpow.pop %v1287
        %v1289 = vmul.f32 %v1171, 1.442695
        %v1290 = vpow.pop %v1289
        %v1291 = vmul.f32 %v1172, 1.442695
        %v1292 = vpow.pop %v1291
        %v1293 = vmul.f32 %v1173, 1.442695
        %v1294 = vpow.pop %v1293
        %v1295 = vmul.f32 %v1174, 1.442695
        %v1296 = vpow.pop %v1295
        %v1297 = vmul.f32 %v1175, 1.442695
        %v1298 = vpow.pop %v1297
        %v1299 = vmul.f32 %v1176, 1.442695
        %v1300 = vpow.pop %v1299
        %v1301 = vmul.f32 %v1177, 1.442695
        %v1302 = vpow.pop %v1301
        %v1303 = vmul.f32 %v1178, 1.442695
        %v1304 = vpow.pop %v1303
        %v1305 = vmul.f32 %v1179, 1.442695
        %v1306 = vpow.pop %v1305
        %v1307 = vmul.f32 %v1180, 1.442695
        %v1308 = vpow.pop %v1307
        %v1309 = vmul.f32 %v1181, 1.442695
        %v1310 = vpow.pop %v1309
        %v1311 = vmul.f32 %v1182, 1.442695
        %v1312 = vpow.pop %v1311
        %v1313 = vmul.f32 %v1183, 1.442695
        %v1314 = vpow.pop %v1313
        %v1315 = vmul.f32 %v1184, 1.442695
        %v1316 = vpow.pop %v1315
        %v1317 = vmul.f32 %v1185, 1.442695
        %v1318 = vpow.pop %v1317
        %v1319 = vmul.f32 %v1186, 1.442695
        %v1320 = vpow.pop %v1319
        %v1321 = vmul.f32 %v1187, 1.442695
        %v1322 = vpow.pop %v1321
        %v1323 = vmul.f32 %v1188, 1.442695
        %v1324 = vpow.pop %v1323
        %v1325 = vmul.f32 %v1189, 1.442695
        %v1326 = vpow.pop %v1325
        %v1327 = vmul.f32 %v1190, 1.442695
        %v1328 = vpow.pop %v1327
        %v1329 = vmul.f32 %v1191, 1.442695
        %v1330 = vpow.pop %v1329
        %v1331 = vmul.f32 %v1192, 1.442695
        %v1332 = vpow.pop %v1331
        %v1333 = vmul.f32 %v1193, 1.442695
        %v1334 = vpow.pop %v1333
        %v1335 = vmul.f32 %v1194, 1.442695
        %v1336 = vpow.pop %v1335
        %v1337 = vmul.f32 %v1195, 1.442695
        %v1338 = vpow.pop %v1337
        %v1339 = vmul.f32 %v1196, 1.442695
        %v1340 = vpow.pop %v1339
        %v1341 = vmul.f32 %v1197, 1.442695
        %v1342 = vpow.pop %v1341
        %v1343 = vmul.f32 %v1198, 1.442695
        %v1344 = vpow.pop %v1343
        %v1345 = vmul.f32 %v1199, 1.442695
        %v1346 = vpow.pop %v1345
        %v1347 = vmul.f32 %v1200, 1.442695
        %v1348 = vpow.pop %v1347
        %v1349 = vmul.f32 %v1201, 1.442695
        %v1350 = vpow.pop %v1349
        %v1351 = vmul.f32 %v1202, 1.442695
        %v1352 = vpow.pop %v1351
        %v1353 = vmul.f32 %v1203, 1.442695
        %v1354 = vpow.pop %v1353
        %v1355 = vmul.f32 %v1204, 1.442695
        %v1356 = vpow.pop %v1355
        %v1357 = vmul.f32 %v1205, 1.442695
        %v1358 = vpow.pop %v1357
        %v1359 = vmul.f32 %v1206, 1.442695
        %v1360 = vpow.pop %v1359
        %v1361 = vmul.f32 %v1207, 1.442695
        %v1362 = vpow.pop %v1361
        %v1363 = vmul.f32 %v1208, 1.442695
        %v1364 = vpow.pop %v1363
        %v1365 = vmul.f32 %v1209, 1.442695
        %v1366 = vpow.pop %v1365
        %v1367 = vmul.f32 %v1210, 1.442695
        %v1368 = vpow.pop %v1367
        %v1369 = vmul.f32 %v1211, 1.442695
        %v1370 = vpow.pop %v1369
        %v1371 = vmul.f32 %v1212, 1.442695
        %v1372 = vpow.pop %v1371
        %v1373 = vadd.f32 %v1214, 1.0
        %v1374 = vadd.f32 %v1216, 1.0
        %v1375 = vadd.f32 %v1218, 1.0
        %v1376 = vadd.f32 %v1220, 1.0
        %v1377 = vadd.f32 %v1222, 1.0
        %v1378 = vadd.f32 %v1224, 1.0
        %v1379 = vadd.f32 %v1226, 1.0
        %v1380 = vadd.f32 %v1228, 1.0
        %v1381 = vadd.f32 %v1230, 1.0
        %v1382 = vadd.f32 %v1232, 1.0
        %v1383 = vadd.f32 %v1234, 1.0
        %v1384 = vadd.f32 %v1236, 1.0
        %v1385 = vadd.f32 %v1238, 1.0
        %v1386 = vadd.f32 %v1240, 1.0
        %v1387 = vadd.f32 %v1242, 1.0
        %v1388 = vadd.f32 %v1244, 1.0
        %v1389 = vadd.f32 %v1246, 1.0
        %v1390 = vadd.f32 %v1248, 1.0
        %v1391 = vadd.f32 %v1250, 1.0
        %v1392 = vadd.f32 %v1252, 1.0
        %v1393 = vadd.f32 %v1254, 1.0
        %v1394 = vadd.f32 %v1256, 1.0
        %v1395 = vadd.f32 %v1258, 1.0
        %v1396 = vadd.f32 %v1260, 1.0
        %v1397 = vadd.f32 %v1262, 1.0
        %v1398 = vadd.f32 %v1264, 1.0
        %v1399 = vadd.f32 %v1266, 1.0
        %v1400 = vadd.f32 %v1268, 1.0
        %v1401 = vadd.f32 %v1270, 1.0
        %v1402 = vadd.f32 %v1272, 1.0
        %v1403 = vadd.f32 %v1274, 1.0
        %v1404 = vadd.f32 %v1276, 1.0
        %v1405 = vadd.f32 %v1278, 1.0
        %v1406 = vadd.f32 %v1280, 1.0
        %v1407 = vadd.f32 %v1282, 1.0
        %v1408 = vadd.f32 %v1284, 1.0
        %v1409 = vadd.f32 %v1286, 1.0
        %v1410 = vadd.f32 %v1288, 1.0
        %v1411 = vadd.f32 %v1290, 1.0
        %v1412 = vadd.f32 %v1292, 1.0
        %v1413 = vadd.f32 %v1294, 1.0
        %v1414 = vadd.f32 %v1296, 1.0
        %v1415 = vadd.f32 %v1298, 1.0
        %v1416 = vadd.f32 %v1300, 1.0
        %v1417 = vadd.f32 %v1302, 1.0
        %v1418 = vadd.f32 %v1304, 1.0
        %v1419 = vadd.f32 %v1306, 1.0
        %v1420 = vadd.f32 %v1308, 1.0
        %v1421 = vadd.f32 %v1310, 1.0
        %v1422 = vadd.f32 %v1312, 1.0
        %v1423 = vadd.f32 %v1314, 1.0
        %v1424 = vadd.f32 %v1316, 1.0
        %v1425 = vadd.f32 %v1318, 1.0
        %v1426 = vadd.f32 %v1320, 1.0
        %v1427 = vadd.f32 %v1322, 1.0
        %v1428 = vadd.f32 %v1324, 1.0
        %v1429 = vadd.f32 %v1326, 1.0
        %v1430 = vadd.f32 %v1328, 1.0
        %v1431 = vadd.f32 %v1330, 1.0
        %v1432 = vadd.f32 %v1332, 1.0
        %v1433 = vadd.f32 %v1334, 1.0
        %v1434 = vadd.f32 %v1336, 1.0
        %v1435 = vadd.f32 %v1338, 1.0
        %v1436 = vadd.f32 %v1340, 1.0
        %v1437 = vadd.f32 %v1342, 1.0
        %v1438 = vadd.f32 %v1344, 1.0
        %v1439 = vadd.f32 %v1346, 1.0
        %v1440 = vadd.f32 %v1348, 1.0
        %v1441 = vadd.f32 %v1350, 1.0
        %v1442 = vadd.f32 %v1352, 1.0
        %v1443 = vadd.f32 %v1354, 1.0
        %v1444 = vadd.f32 %v1356, 1.0
        %v1445 = vadd.f32 %v1358, 1.0
        %v1446 = vadd.f32 %v1360, 1.0
        %v1447 = vadd.f32 %v1362, 1.0
        %v1448 = vadd.f32 %v1364, 1.0
        %v1449 = vadd.f32 %v1366, 1.0
        %v1450 = vadd.f32 %v1368, 1.0
        %v1451 = vadd.f32 %v1370, 1.0
        %v1452 = vadd.f32 %v1372, 1.0
        %v1453 = vrcp.pop %v1373
        %v1454 = vmul.f32 1.0, %v1453
        %v1455 = vrcp.pop %v1374
        %v1456 = vmul.f32 1.0, %v1455
        %v1457 = vrcp.pop %v1375
        %v1458 = vmul.f32 1.0, %v1457
        %v1459 = vrcp.pop %v1376
        %v1460 = vmul.f32 1.0, %v1459
        %v1461 = vrcp.pop %v1377
        %v1462 = vmul.f32 1.0, %v1461
        %v1463 = vrcp.pop %v1378
        %v1464 = vmul.f32 1.0, %v1463
        %v1465 = vrcp.pop %v1379
        %v1466 = vmul.f32 1.0, %v1465
        %v1467 = vrcp.pop %v1380
        %v1468 = vmul.f32 1.0, %v1467
        %v1469 = vrcp.pop %v1381
        %v1470 = vmul.f32 1.0, %v1469
        %v1471 = vrcp.pop %v1382
        %v1472 = vmul.f32 1.0, %v1471
        %v1473 = vrcp.pop %v1383
        %v1474 = vmul.f32 1.0, %v1473
        %v1475 = vrcp.pop %v1384
        %v1476 = vmul.f32 1.0, %v1475
        %v1477 = vrcp.pop %v1385
        %v1478 = vmul.f32 1.0, %v1477
        %v1479 = vrcp.pop %v1386
        %v1480 = vmul.f32 1.0, %v1479
        %v1481 = vrcp.pop %v1387
        %v1482 = vmul.f32 1.0, %v1481
        %v1483 = vrcp.pop %v1388
        %v1484 = vmul.f32 1.0, %v1483
        %v1485 = vrcp.pop %v1389
        %v1486 = vmul.f32 1.0, %v1485
        %v1487 = vrcp.pop %v1390
        %v1488 = vmul.f32 1.0, %v1487
        %v1489 = vrcp.pop %v1391
        %v1490 = vmul.f32 1.0, %v1489
        %v1491 = vrcp.pop %v1392
        %v1492 = vmul.f32 1.0, %v1491
        %v1493 = vrcp.pop %v1393
        %v1494 = vmul.f32 1.0, %v1493
        %v1495 = vrcp.pop %v1394
        %v1496 = vmul.f32 1.0, %v1495
        %v1497 = vrcp.pop %v1395
        %v1498 = vmul.f32 1.0, %v1497
        %v1499 = vrcp.pop %v1396
        %v1500 = vmul.f32 1.0, %v1499
        %v1501 = vrcp.pop %v1397
        %v1502 = vmul.f32 1.0, %v1501
        %v1503 = vrcp.pop %v1398
        %v1504 = vmul.f32 1.0, %v1503
        %v1505 = vrcp.pop %v1399
        %v1506 = vmul.f32 1.0, %v1505
        %v1507 = vrcp.pop %v1400
        %v1508 = vmul.f32 1.0, %v1507
        %v1509 = vrcp.pop %v1401
        %v1510 = vmul.f32 1.0, %v1509
        %v1511 = vrcp.pop %v1402
        %v1512 = vmul.f32 1.0, %v1511
        %v1513 = vrcp.pop %v1403
        %v1514 = vmul.f32 1.0, %v1513
        %v1515 = vrcp.pop %v1404
        %v1516 = vmul.f32 1.0, %v1515
        %v1517 = vrcp.pop %v1405
        %v1518 = vmul.f32 1.0, %v1517
        %v1519 = vrcp.pop %v1406
        %v1520 = vmul.f32 1.0, %v1519
        %v1521 = vrcp.pop %v1407
        %v1522 = vmul.f32 1.0, %v1521
        %v1523 = vrcp.pop %v1408
        %v1524 = vmul.f32 1.0, %v1523
        %v1525 = vrcp.pop %v1409
        %v1526 = vmul.f32 1.0, %v1525
        %v1527 = vrcp.pop %v1410
        %v1528 = vmul.f32 1.0, %v1527
        %v1529 = vrcp.pop %v1411
        %v1530 = vmul.f32 1.0, %v1529
        %v1531 = vrcp.pop %v1412
        %v1532 = vmul.f32 1.0, %v1531
        %v1533 = vrcp.pop %v1413
        %v1534 = vmul.f32 1.0, %v1533
        %v1535 = vrcp.pop %v1414
        %v1536 = vmul.f32 1.0, %v1535
        %v1537 = vrcp.pop %v1415
        %v1538 = vmul.f32 1.0, %v1537
        %v1539 = vrcp.pop %v1416
        %v1540 = vmul.f32 1.0, %v1539
        %v1541 = vrcp.pop %v1417
        %v1542 = vmul.f32 1.0, %v1541
        %v1543 = vrcp.pop %v1418
        %v1544 = vmul.f32 1.0, %v1543
        %v1545 = vrcp.pop %v1419
        %v1546 = vmul.f32 1.0, %v1545
        %v1547 = vrcp.pop %v1420
        %v1548 = vmul.f32 1.0, %v1547
        %v1549 = vrcp.pop %v1421
        %v1550 = vmul.f32 1.0, %v1549
        %v1551 = vrcp.pop %v1422
        %v1552 = vmul.f32 1.0, %v1551
        %v1553 = vrcp.pop %v1423
        %v1554 = vmul.f32 1.0, %v1553
        %v1555 = vrcp.pop %v1424
        %v1556 = vmul.f32 1.0, %v1555
        %v1557 = vrcp.pop %v1425
        %v1558 = vmul.f32 1.0, %v1557
        %v1559 = vrcp.pop %v1426
        %v1560 = vmul.f32 1.0, %v1559
        %v1561 = vrcp.pop %v1427
        %v1562 = vmul.f32 1.0, %v1561
        %v1563 = vrcp.pop %v1428
        %v1564 = vmul.f32 1.0, %v1563
        %v1565 = vrcp.pop %v1429
        %v1566 = vmul.f32 1.0, %v1565
        %v1567 = vrcp.pop %v1430
        %v1568 = vmul.f32 1.0, %v1567
        %v1569 = vrcp.pop %v1431
        %v1570 = vmul.f32 1.0, %v1569
        %v1571 = vrcp.pop %v1432
        %v1572 = vmul.f32 1.0, %v1571
        %v1573 = vrcp.pop %v1433
        %v1574 = vmul.f32 1.0, %v1573
        %v1575 = vrcp.pop %v1434
        %v1576 = vmul.f32 1.0, %v1575
        %v1577 = vrcp.pop %v1435
        %v1578 = vmul.f32 1.0, %v1577
        %v1579 = vrcp.pop %v1436
        %v1580 = vmul.f32 1.0, %v1579
        %v1581 = vrcp.pop %v1437
        %v1582 = vmul.f32 1.0, %v1581
        %v1583 = vrcp.pop %v1438
        %v1584 = vmul.f32 1.0, %v1583
        %v1585 = vrcp.pop %v1439
        %v1586 = vmul.f32 1.0, %v1585
        %v1587 = vrcp.pop %v1440
        %v1588 = vmul.f32 1.0, %v1587
        %v1589 = vrcp.pop %v1441
        %v1590 = vmul.f32 1.0, %v1589
        %v1591 = vrcp.pop %v1442
        %v1592 = vmul.f32 1.0, %v1591
        %v1593 = vrcp.pop %v1443
        %v1594 = vmul.f32 1.0, %v1593
        %v1595 = vrcp.pop %v1444
        %v1596 = vmul.f32 1.0, %v1595
        %v1597 = vrcp.pop %v1445
        %v1598 = vmul.f32 1.0, %v1597
        %v1599 = vrcp.pop %v1446
        %v1600 = vmul.f32 1.0, %v1599
        %v1601 = vrcp.pop %v1447
        %v1602 = vmul.f32 1.0, %v1601
        %v1603 = vrcp.pop %v1448
        %v1604 = vmul.f32 1.0, %v1603
        %v1605 = vrcp.pop %v1449
        %v1606 = vmul.f32 1.0, %v1605
        %v1607 = vrcp.pop %v1450
        %v1608 = vmul.f32 1.0, %v1607
        %v1609 = vrcp.pop %v1451
        %v1610 = vmul.f32 1.0, %v1609
        %v1611 = vrcp.pop %v1452
        %v1612 = vmul.f32 1.0, %v1611
        %v1613 = vmul.f32 %v803, %v1454
        %v1614 = vmul.f32 %v805, %v1456
        %v1615 = vmul.f32 %v876, %v1458
        %v1616 = vmul.f32 %v878, %v1460
        %v1617 = vmul.f32 %v949, %v1462
        %v1618 = vmul.f32 %v951, %v1464
        %v1619 = vmul.f32 %v1022, %v1466
        %v1620 = vmul.f32 %v1024, %v1468
        %v1621 = vmul.f32 %v1095, %v1470
        %v1622 = vmul.f32 %v1097, %v1472
        %v1623 = vmul.f32 %v807, %v1474
        %v1624 = vmul.f32 %v809, %v1476
        %v1625 = vmul.f32 %v880, %v1478
        %v1626 = vmul.f32 %v882, %v1480
        %v1627 = vmul.f32 %v953, %v1482
        %v1628 = vmul.f32 %v955, %v1484
        %v1629 = vmul.f32 %v1026, %v1486
        %v1630 = vmul.f32 %v1028, %v1488
        %v1631 = vmul.f32 %v1099, %v1490
        %v1632 = vmul.f32 %v1101, %v1492
        %v1633 = vmul.f32 %v813, %v1494
        %v1634 = vmul.f32 %v815, %v1496
        %v1635 = vmul.f32 %v886, %v1498
        %v1636 = vmul.f32 %v888, %v1500
        %v1637 = vmul.f32 %v959, %v1502
        %v1638 = vmul.f32 %v961, %v1504
        %v1639 = vmul.f32 %v1032, %v1506
        %v1640 = vmul.f32 %v1034, %v1508
        %v1641 = vmul.f32 %v1105, %v1510
        %v1642 = vmul.f32 %v1107, %v1512
        %v1643 = vmul.f32 %v817, %v1514
        %v1644 = vmul.f32 %v819, %v1516
        %v1645 = vmul.f32 %v890, %v1518
        %v1646 = vmul.f32 %v892, %v1520
        %v1647 = vmul.f32 %v963, %v1522
        %v1648 = vmul.f32 %v965, %v1524
        %v1649 = vmul.f32 %v1036, %v1526
        %v1650 = vmul.f32 %v1038, %v1528
        %v1651 = vmul.f32 %v1109, %v1530
        %v1652 = vmul.f32 %v1111, %v1532
        %v1653 = vmul.f32 %v823, %v1534
        %v1654 = vmul.f32 %v825, %v1536
        %v1655 = vmul.f32 %v896, %v1538
        %v1656 = vmul.f32 %v898, %v1540
        %v1657 = vmul.f32 %v969, %v1542
        %v1658 = vmul.f32 %v971, %v1544
        %v1659 = vmul.f32 %v1042, %v1546
        %v1660 = vmul.f32 %v1044, %v1548
        %v1661 = vmul.f32 %v1115, %v1550
        %v1662 = vmul.f32 %v1117, %v1552
        %v1663 = vmul.f32 %v827, %v1554
        %v1664 = vmul.f32 %v829, %v1556
        %v1665 = vmul.f32 %v900, %v1558
        %v1666 = vmul.f32 %v902, %v1560
        %v1667 = vmul.f32 %v973, %v1562
        %v1668 = vmul.f32 %v975, %v1564
        %v1669 = vmul.f32 %v1046, %v1566
        %v1670 = vmul.f32 %v1048, %v1568
        %v1671 = vmul.f32 %v1119, %v1570
        %v1672 = vmul.f32 %v1121, %v1572
        %v1673 = vmul.f32 %v833, %v1574
        %v1674 = vmul.f32 %v835, %v1576
        %v1675 = vmul.f32 %v906, %v1578
        %v1676 = vmul.f32 %v908, %v1580
        %v1677 = vmul.f32 %v979, %v1582
        %v1678 = vmul.f32 %v981, %v1584
        %v1679 = vmul.f32 %v1052, %v1586
        %v1680 = vmul.f32 %v1054, %v1588
        %v1681 = vmul.f32 %v1125, %v1590
        %v1682 = vmul.f32 %v1127, %v1592
        %v1683 = vmul.f32 %v837, %v1594
        %v1684 = vmul.f32 %v839, %v1596
        %v1685 = vmul.f32 %v910, %v1598
        %v1686 = vmul.f32 %v912, %v1600
        %v1687 = vmul.f32 %v983, %v1602
        %v1688 = vmul.f32 %v985, %v1604
        %v1689 = vmul.f32 %v1056, %v1606
        %v1690 = vmul.f32 %v1058, %v1608
        %v1691 = vmul.f32 %v1129, %v1610
        %v1692 = vmul.f32 %v1131, %v1612
        %v1693 = vld [vmem:[#allocation2] sm:$0xff]
        %v1694 = vld [vmem:[#allocation2 + $0x8] sm:$0xff]
        %v1695 = vld [vmem:[#allocation2 + $0x10] sm:$0xff]
        %v1696 = vld [vmem:[#allocation2 + $0x18] sm:$0xff]
        %v1697 = vld [vmem:[#allocation2 + $0x20] sm:$0xff]
        %v1698 = vld [vmem:[#allocation2 + $0x28] sm:$0xff]
        %v1699 = vld [vmem:[#allocation2 + $0x30] sm:$0xff]
        %v1700 = vld [vmem:[#allocation2 + $0x38] sm:$0xff]
        %v1701 = vld [vmem:[#allocation2 + $0x40] sm:$0xff]
        %v1702 = vld [vmem:[#allocation2 + $0x48] sm:$0xff]
        %v1703 = vadd.f32 %v1613, %v1623
        %v1704 = vadd.f32 %v1703, %v1633
        %v1705 = vadd.f32 %v1704, %v1643
        %v1706 = vadd.f32 %v1705, %v1653
        %v1707 = vadd.f32 %v1706, %v1663
        %v1708 = vadd.f32 %v1707, %v1673
        %v1709 = vadd.f32 %v1708, %v1683
        %v1710 = vadd.f32 %v1614, %v1624
        %v1711 = vadd.f32 %v1710, %v1634
        %v1712 = vadd.f32 %v1711, %v1644
        %v1713 = vadd.f32 %v1712, %v1654
        %v1714 = vadd.f32 %v1713, %v1664
        %v1715 = vadd.f32 %v1714, %v1674
        %v1716 = vadd.f32 %v1715, %v1684
        %v1717 = vadd.f32 %v1615, %v1625
        %v1718 = vadd.f32 %v1717, %v1635
        %v1719 = vadd.f32 %v1718, %v1645
        %v1720 = vadd.f32 %v1719, %v1655
        %v1721 = vadd.f32 %v1720, %v1665
        %v1722 = vadd.f32 %v1721, %v1675
        %v1723 = vadd.f32 %v1722, %v1685
        %v1724 = vadd.f32 %v1616, %v1626
        %v1725 = vadd.f32 %v1724, %v1636
        %v1726 = vadd.f32 %v1725, %v1646
        %v1727 = vadd.f32 %v1726, %v1656
        %v1728 = vadd.f32 %v1727, %v1666
        %v1729 = vadd.f32 %v1728, %v1676
        %v1730 = vadd.f32 %v1729, %v1686
        %v1731 = vadd.f32 %v1617, %v1627
        %v1732 = vadd.f32 %v1731, %v1637
        %v1733 = vadd.f32 %v1732, %v1647
        %v1734 = vadd.f32 %v1733, %v1657
        %v1735 = vadd.f32 %v1734, %v1667
        %v1736 = vadd.f32 %v1735, %v1677
        %v1737 = vadd.f32 %v1736, %v1687
        %v1738 = vadd.f32 %v1618, %v1628
        %v1739 = vadd.f32 %v1738, %v1638
        %v1740 = vadd.f32 %v1739, %v1648
        %v1741 = vadd.f32 %v1740, %v1658
        %v1742 = vadd.f32 %v1741, %v1668
        %v1743 = vadd.f32 %v1742, %v1678
        %v1744 = vadd.f32 %v1743, %v1688
        %v1745 = vadd.f32 %v1619, %v1629
        %v1746 = vadd.f32 %v1745, %v1639
        %v1747 = vadd.f32 %v1746, %v1649
        %v1748 = vadd.f32 %v1747, %v1659
        %v1749 = vadd.f32 %v1748, %v1669
        %v1750 = vadd.f32 %v1749, %v1679
        %v1751 = vadd.f32 %v1750, %v1689
        %v1752 = vadd.f32 %v1620, %v1630
        %v1753 = vadd.f32 %v1752, %v1640
        %v1754 = vadd.f32 %v1753, %v1650
        %v1755 = vadd.f32 %v1754, %v1660
        %v1756 = vadd.f32 %v1755, %v1670
        %v1757 = vadd.f32 %v1756, %v1680
        %v1758 = vadd.f32 %v1757, %v1690
        %v1759 = vadd.f32 %v1621, %v1631
        %v1760 = vadd.f32 %v1759, %v1641
        %v1761 = vadd.f32 %v1760, %v1651
        %v1762 = vadd.f32 %v1761, %v1661
        %v1763 = vadd.f32 %v1762, %v1671
        %v1764 = vadd.f32 %v1763, %v1681
        %v1765 = vadd.f32 %v1764, %v1691
        %v1766 = vadd.f32 %v1622, %v1632
        %v1767 = vadd.f32 %v1766, %v1642
        %v1768 = vadd.f32 %v1767, %v1652
        %v1769 = vadd.f32 %v1768, %v1662
        %v1770 = vadd.f32 %v1769, %v1672
        %v1771 = vadd.f32 %v1770, %v1682
        %v1772 = vadd.f32 %v1771, %v1692
        %v1773 = vadd.f32 %v1693, %v1709
        %v1774 = vadd.f32 %v1694, %v1716
        %v1775 = vadd.f32 %v1695, %v1723
        %v1776 = vadd.f32 %v1696, %v1730
        %v1777 = vadd.f32 %v1697, %v1737
        %v1778 = vadd.f32 %v1698, %v1744
        %v1779 = vadd.f32 %v1699, %v1751
        %v1780 = vadd.f32 %v1700, %v1758
        %v1781 = vadd.f32 %v1701, %v1765
        %v1782 = vadd.f32 %v1702, %v1772
        %1783 = vst [vmem:[#allocation2] sm:$0xff] %v1773
        %1784 = vst [vmem:[#allocation2 + $0x8] sm:$0xff] %v1774
        %1785 = vst [vmem:[#allocation2 + $0x10] sm:$0xff] %v1775
        %1786 = vst [vmem:[#allocation2 + $0x18] sm:$0xff] %v1776
        %1787 = vst [vmem:[#allocation2 + $0x20] sm:$0xff] %v1777
        %1788 = vst [vmem:[#allocation2 + $0x28] sm:$0xff] %v1778
        %1789 = vst [vmem:[#allocation2 + $0x30] sm:$0xff] %v1779
        %1790 = vst [vmem:[#allocation2 + $0x38] sm:$0xff] %v1780
        %1791 = vst [vmem:[#allocation2 + $0x40] sm:$0xff] %v1781
        %1792 = vst [vmem:[#allocation2 + $0x48] sm:$0xff] %v1782
        // Predicated region
        $region65: #{tpu_custom_call.1} parent=51 // pred_check
          %p1793 = pneg %p379
        $region66: #{tpu_custom_call.1} parent=51 // pred_check_branch
          %1795 = sbr.rel (%p1793) target = $region68
        $region67: #{tpu_custom_call.1} parent=51 // pred_region
          %v1796 = vld [vmem:[#allocation2] sm:$0xff]
          %v1797 = vld [vmem:[#allocation2 + $0x8] sm:$0xff]
          %v1798 = vld [vmem:[#allocation2 + $0x10] sm:$0xff]
          %v1799 = vld [vmem:[#allocation2 + $0x18] sm:$0xff]
          %v1800 = vld [vmem:[#allocation2 + $0x20] sm:$0xff]
          %v1801 = vld [vmem:[#allocation2 + $0x28] sm:$0xff]
          %v1802 = vld [vmem:[#allocation2 + $0x30] sm:$0xff]
          %v1803 = vld [vmem:[#allocation2 + $0x38] sm:$0xff]
          %v1804 = vld [vmem:[#allocation2 + $0x40] sm:$0xff]
          %v1805 = vld [vmem:[#allocation2 + $0x48] sm:$0xff]
          %v1806 = vrot.slane %v1796, 4
          %v1807 = vadd.f32 %v1796, %v1806
          %v1808 = vrot.slane %v1807, 2
          %v1809 = vadd.f32 %v1807, %v1808
          %v1810 = vrot.slane %v1809, 1
          %v1811 = vadd.f32 %v1809, %v1810
          %v1812 = vrot.slane %v1797, 4
          %v1813 = vadd.f32 %v1797, %v1812
          %v1814 = vrot.slane %v1813, 2
          %v1815 = vadd.f32 %v1813, %v1814
          %v1816 = vrot.slane %v1815, 1
          %v1817 = vadd.f32 %v1815, %v1816
          %v1818 = vrot.slane %v1798, 4
          %v1819 = vadd.f32 %v1798, %v1818
          %v1820 = vrot.slane %v1819, 2
          %v1821 = vadd.f32 %v1819, %v1820
          %v1822 = vrot.slane %v1821, 1
          %v1823 = vadd.f32 %v1821, %v1822
          %v1824 = vrot.slane %v1799, 4
          %v1825 = vadd.f32 %v1799, %v1824
          %v1826 = vrot.slane %v1825, 2
          %v1827 = vadd.f32 %v1825, %v1826
          %v1828 = vrot.slane %v1827, 1
          %v1829 = vadd.f32 %v1827, %v1828
          %v1830 = vrot.slane %v1800, 4
          %v1831 = vadd.f32 %v1800, %v1830
          %v1832 = vrot.slane %v1831, 2
          %v1833 = vadd.f32 %v1831, %v1832
          %v1834 = vrot.slane %v1833, 1
          %v1835 = vadd.f32 %v1833, %v1834
          %v1836 = vrot.slane %v1801, 4
          %v1837 = vadd.f32 %v1801, %v1836
          %v1838 = vrot.slane %v1837, 2
          %v1839 = vadd.f32 %v1837, %v1838
          %v1840 = vrot.slane %v1839, 1
          %v1841 = vadd.f32 %v1839, %v1840
          %v1842 = vrot.slane %v1802, 4
          %v1843 = vadd.f32 %v1802, %v1842
          %v1844 = vrot.slane %v1843, 2
          %v1845 = vadd.f32 %v1843, %v1844
          %v1846 = vrot.slane %v1845, 1
          %v1847 = vadd.f32 %v1845, %v1846
          %v1848 = vrot.slane %v1803, 4
          %v1849 = vadd.f32 %v1803, %v1848
          %v1850 = vrot.slane %v1849, 2
          %v1851 = vadd.f32 %v1849, %v1850
          %v1852 = vrot.slane %v1851, 1
          %v1853 = vadd.f32 %v1851, %v1852
          %v1854 = vrot.slane %v1804, 4
          %v1855 = vadd.f32 %v1804, %v1854
          %v1856 = vrot.slane %v1855, 2
          %v1857 = vadd.f32 %v1855, %v1856
          %v1858 = vrot.slane %v1857, 1
          %v1859 = vadd.f32 %v1857, %v1858
          %v1860 = vrot.slane %v1805, 4
          %v1861 = vadd.f32 %v1805, %v1860
          %v1862 = vrot.slane %v1861, 2
          %v1863 = vadd.f32 %v1861, %v1862
          %v1864 = vrot.slane %v1863, 1
          %v1865 = vadd.f32 %v1863, %v1864
          %v1866 = vmul.f32 %v1811, 0.015625
          %v1867 = vmul.f32 %v1817, 0.015625
          %v1868 = vmul.f32 %v1823, 0.015625
          %v1869 = vmul.f32 %v1829, 0.015625
          %v1870 = vmul.f32 %v1835, 0.015625
          %v1871 = vmul.f32 %v1841, 0.015625
          %v1872 = vmul.f32 %v1847, 0.015625
          %v1873 = vmul.f32 %v1853, 0.015625
          %v1874 = vmul.f32 %v1859, 0.015625
          %v1875 = vmul.f32 %v1865, 0.015625
          %v1876 = vld [vmem:[%s377] sm:$0xff]
          %v1877 = vld [vmem:[%s377 + $0x8] sm:$0x3]
          %v1878 = vmul.f32 %v1876, 0.6666667
          %v1879 = vmul.f32 %v1877, 0.6666667
          %v1882 = vlaneseq
          %v1883 = vshrl.u32 %v1882, 7
          %v1884 = vsub.s32 0, %v1883
          %v1885 = vrot.slane %v1878, %v1884
          %v1886 = vlaneseq
          %v1887 = vshrl.u32 %v1886, 7
          %v1888 = vsub.s32 1, %v1887
          %v1889 = vrot.slane %v1878, %v1888
          %v1890 = vlaneseq
          %v1891 = vshrl.u32 %v1890, 7
          %v1892 = vsub.s32 2, %v1891
          %v1893 = vrot.slane %v1878, %v1892
          %v1894 = vlaneseq
          %v1895 = vshrl.u32 %v1894, 7
          %v1896 = vsub.s32 3, %v1895
          %v1897 = vrot.slane %v1878, %v1896
          %v1898 = vlaneseq
          %v1899 = vshrl.u32 %v1898, 7
          %v1900 = vsub.s32 4, %v1899
          %v1901 = vrot.slane %v1878, %v1900
          %v1902 = vlaneseq
          %v1903 = vshrl.u32 %v1902, 7
          %v1904 = vsub.s32 5, %v1903
          %v1905 = vrot.slane %v1878, %v1904
          %v1906 = vlaneseq
          %v1907 = vshrl.u32 %v1906, 7
          %v1908 = vsub.s32 6, %v1907
          %v1909 = vrot.slane %v1878, %v1908
          %v1910 = vlaneseq
          %v1911 = vshrl.u32 %v1910, 7
          %v1912 = vsub.s32 7, %v1911
          %v1913 = vrot.slane %v1878, %v1912
          %v1914 = vlaneseq
          %v1915 = vshrl.u32 %v1914, 7
          %v1916 = vsub.s32 0, %v1915
          %v1917 = vrot.slane %v1879, %v1916
          %v1918 = vlaneseq
          %v1919 = vshrl.u32 %v1918, 7
          %v1920 = vsub.s32 1, %v1919
          %v1921 = vrot.slane %v1879, %v1920
          %v1932 = vmul.f32 %v1866, %v1885
          %v1933 = vmul.f32 %v1867, %v1889
          %v1934 = vmul.f32 %v1868, %v1893
          %v1935 = vmul.f32 %v1869, %v1897
          %v1936 = vmul.f32 %v1870, %v1901
          %v1937 = vmul.f32 %v1871, %v1905
          %v1938 = vmul.f32 %v1872, %v1909
          %v1939 = vmul.f32 %v1873, %v1913
          %v1940 = vmul.f32 %v1874, %v1917
          %v1941 = vmul.f32 %v1875, %v1921
          %v1942 = vld [vmem:[#allocation6] sm:$0xff]
          %v1943 = vld [vmem:[#allocation6 + $0x8] sm:$0xff]
          %v1944 = vld [vmem:[#allocation6 + $0x10] sm:$0xff]
          %v1945 = vld [vmem:[#allocation6 + $0x18] sm:$0xff]
          %v1946 = vld [vmem:[#allocation6 + $0x20] sm:$0xff]
          %v1947 = vld [vmem:[#allocation6 + $0x28] sm:$0xff]
          %v1948 = vld [vmem:[#allocation6 + $0x30] sm:$0xff]
          %v1949 = vld [vmem:[#allocation6 + $0x38] sm:$0xff]
          %v1950 = vld [vmem:[#allocation6 + $0x40] sm:$0xff]
          %v1951 = vld [vmem:[#allocation6 + $0x48] sm:$0xff]
          %v1952 = vld [vmem:[#allocation6 + $0x50] sm:$0xff]
          %v1953 = vld [vmem:[#allocation6 + $0x58] sm:$0xff]
          %v1954 = vld [vmem:[#allocation6 + $0x60] sm:$0xff]
          %v1955 = vld [vmem:[#allocation6 + $0x68] sm:$0xff]
          %v1956 = vld [vmem:[#allocation6 + $0x70] sm:$0xff]
          %v1957 = vld [vmem:[#allocation6 + $0x78] sm:$0xff]
          %v1958 = vld [vmem:[#allocation6 + $0x80] sm:$0xff]
          %v1959 = vld [vmem:[#allocation6 + $0x88] sm:$0xff]
          %v1960 = vld [vmem:[#allocation6 + $0x90] sm:$0xff]
          %v1961 = vld [vmem:[#allocation6 + $0x98] sm:$0xff]
          %v1962 = vld [vmem:[#allocation6 + $0xa0] sm:$0xff]
          %v1963 = vld [vmem:[#allocation6 + $0xa8] sm:$0xff]
          %v1964 = vld [vmem:[#allocation6 + $0xb0] sm:$0xff]
          %v1965 = vld [vmem:[#allocation6 + $0xb8] sm:$0xff]
          %v1966 = vld [vmem:[#allocation6 + $0xc0] sm:$0xff]
          %v1967 = vld [vmem:[#allocation6 + $0xc8] sm:$0xff]
          %v1968 = vld [vmem:[#allocation6 + $0xd0] sm:$0xff]
          %v1969 = vld [vmem:[#allocation6 + $0xd8] sm:$0xff]
          %v1970 = vld [vmem:[#allocation6 + $0xe0] sm:$0xff]
          %v1971 = vld [vmem:[#allocation6 + $0xe8] sm:$0xff]
          %v1972 = vld [vmem:[#allocation6 + $0xf0] sm:$0xff]
          %v1973 = vld [vmem:[#allocation6 + $0xf8] sm:$0xff]
          %v1974 = vld [vmem:[#allocation6 + $0x100] sm:$0xff]
          %v1975 = vld [vmem:[#allocation6 + $0x108] sm:$0xff]
          %v1976 = vld [vmem:[#allocation6 + $0x110] sm:$0xff]
          %v1977 = vld [vmem:[#allocation6 + $0x118] sm:$0xff]
          %v1978 = vld [vmem:[#allocation6 + $0x120] sm:$0xff]
          %v1979 = vld [vmem:[#allocation6 + $0x128] sm:$0xff]
          %v1980 = vld [vmem:[#allocation6 + $0x130] sm:$0xff]
          %v1981 = vld [vmem:[#allocation6 + $0x138] sm:$0xff]
          %v1982 = vld [vmem:[#allocation6 + $0x140] sm:$0xff]
          %v1983 = vld [vmem:[#allocation6 + $0x148] sm:$0xff]
          %v1984 = vld [vmem:[#allocation6 + $0x150] sm:$0xff]
          %v1985 = vld [vmem:[#allocation6 + $0x158] sm:$0xff]
          %v1986 = vld [vmem:[#allocation6 + $0x160] sm:$0xff]
          %v1987 = vld [vmem:[#allocation6 + $0x168] sm:$0xff]
          %v1988 = vld [vmem:[#allocation6 + $0x170] sm:$0xff]
          %v1989 = vld [vmem:[#allocation6 + $0x178] sm:$0xff]
          %v1990 = vld [vmem:[#allocation6 + $0x180] sm:$0xff]
          %v1991 = vld [vmem:[#allocation6 + $0x188] sm:$0xff]
          %v1992 = vld [vmem:[#allocation6 + $0x190] sm:$0xff]
          %v1993 = vld [vmem:[#allocation6 + $0x198] sm:$0xff]
          %v1994 = vld [vmem:[#allocation6 + $0x1a0] sm:$0xff]
          %v1995 = vld [vmem:[#allocation6 + $0x1a8] sm:$0xff]
          %v1996 = vld [vmem:[#allocation6 + $0x1b0] sm:$0xff]
          %v1997 = vld [vmem:[#allocation6 + $0x1b8] sm:$0xff]
          %v1998 = vld [vmem:[#allocation6 + $0x1c0] sm:$0xff]
          %v1999 = vld [vmem:[#allocation6 + $0x1c8] sm:$0xff]
          %v2000 = vld [vmem:[#allocation6 + $0x1d0] sm:$0xff]
          %v2001 = vld [vmem:[#allocation6 + $0x1d8] sm:$0xff]
          %v2002 = vld [vmem:[#allocation6 + $0x1e0] sm:$0xff]
          %v2003 = vld [vmem:[#allocation6 + $0x1e8] sm:$0xff]
          %v2004 = vld [vmem:[#allocation6 + $0x1f0] sm:$0xff]
          %v2005 = vld [vmem:[#allocation6 + $0x1f8] sm:$0xff]
          %v2006 = vld [vmem:[#allocation6 + $0x200] sm:$0xff]
          %v2007 = vld [vmem:[#allocation6 + $0x208] sm:$0xff]
          %v2008 = vld [vmem:[#allocation6 + $0x210] sm:$0xff]
          %v2009 = vld [vmem:[#allocation6 + $0x218] sm:$0xff]
          %v2010 = vld [vmem:[#allocation6 + $0x220] sm:$0xff]
          %v2011 = vld [vmem:[#allocation6 + $0x228] sm:$0xff]
          %v2012 = vld [vmem:[#allocation6 + $0x230] sm:$0xff]
          %v2013 = vld [vmem:[#allocation6 + $0x238] sm:$0xff]
          %v2014 = vld [vmem:[#allocation6 + $0x240] sm:$0xff]
          %v2015 = vld [vmem:[#allocation6 + $0x248] sm:$0xff]
          %v2016 = vld [vmem:[#allocation6 + $0x250] sm:$0xff]
          %v2017 = vld [vmem:[#allocation6 + $0x258] sm:$0xff]
          %v2018 = vld [vmem:[#allocation6 + $0x260] sm:$0xff]
          %v2019 = vld [vmem:[#allocation6 + $0x268] sm:$0xff]
          %v2020 = vld [vmem:[#allocation6 + $0x270] sm:$0xff]
          %v2021 = vld [vmem:[#allocation6 + $0x278] sm:$0xff]
          %v2022 = vld [vmem:[#allocation6 + $0x280] sm:$0xff]
          %v2023 = vld [vmem:[#allocation6 + $0x288] sm:$0xff]
          %v2024 = vld [vmem:[#allocation6 + $0x290] sm:$0xff]
          %v2025 = vld [vmem:[#allocation6 + $0x298] sm:$0xff]
          %v2026 = vld [vmem:[#allocation6 + $0x2a0] sm:$0xff]
          %v2027 = vld [vmem:[#allocation6 + $0x2a8] sm:$0xff]
          %v2028 = vld [vmem:[#allocation6 + $0x2b0] sm:$0xff]
          %v2029 = vld [vmem:[#allocation6 + $0x2b8] sm:$0xff]
          %v2030 = vld [vmem:[#allocation6 + $0x2c0] sm:$0xff]
          %v2031 = vld [vmem:[#allocation6 + $0x2c8] sm:$0xff]
          %v2032 = vld [vmem:[#allocation6 + $0x2d0] sm:$0xff]
          %v2033 = vld [vmem:[#allocation6 + $0x2d8] sm:$0xff]
          %v2034 = vld [vmem:[#allocation6 + $0x2e0] sm:$0xff]
          %v2035 = vld [vmem:[#allocation6 + $0x2e8] sm:$0xff]
          %v2036 = vld [vmem:[#allocation6 + $0x2f0] sm:$0xff]
          %v2037 = vld [vmem:[#allocation6 + $0x2f8] sm:$0xff]
          %v2038 = vld [vmem:[#allocation6 + $0x300] sm:$0xff]
          %v2039 = vld [vmem:[#allocation6 + $0x308] sm:$0xff]
          %v2040 = vld [vmem:[#allocation6 + $0x310] sm:$0xff]
          %v2041 = vld [vmem:[#allocation6 + $0x318] sm:$0xff]
          %v2042 = vld [vmem:[#allocation6 + $0x320] sm:$0xff]
          %v2043 = vld [vmem:[#allocation6 + $0x328] sm:$0xff]
          %v2044 = vld [vmem:[#allocation6 + $0x330] sm:$0xff]
          %v2045 = vld [vmem:[#allocation6 + $0x338] sm:$0xff]
          %v2046 = vld [vmem:[#allocation6 + $0x340] sm:$0xff]
          %v2047 = vld [vmem:[#allocation6 + $0x348] sm:$0xff]
          %v2048 = vld [vmem:[#allocation6 + $0x350] sm:$0xff]
          %v2049 = vld [vmem:[#allocation6 + $0x358] sm:$0xff]
          %v2050 = vld [vmem:[#allocation6 + $0x360] sm:$0xff]
          %v2051 = vld [vmem:[#allocation6 + $0x368] sm:$0xff]
          %v2052 = vld [vmem:[#allocation6 + $0x370] sm:$0xff]
          %v2053 = vld [vmem:[#allocation6 + $0x378] sm:$0xff]
          %v2054 = vld [vmem:[#allocation6 + $0x380] sm:$0xff]
          %v2055 = vld [vmem:[#allocation6 + $0x388] sm:$0xff]
          %v2056 = vld [vmem:[#allocation6 + $0x390] sm:$0xff]
          %v2057 = vld [vmem:[#allocation6 + $0x398] sm:$0xff]
          %v2058 = vld [vmem:[#allocation6 + $0x3a0] sm:$0xff]
          %v2059 = vld [vmem:[#allocation6 + $0x3a8] sm:$0xff]
          %v2060 = vld [vmem:[#allocation6 + $0x3b0] sm:$0xff]
          %v2061 = vld [vmem:[#allocation6 + $0x3b8] sm:$0xff]
          %v2062 = vld [vmem:[#allocation6 + $0x3c0] sm:$0xff]
          %v2063 = vld [vmem:[#allocation6 + $0x3c8] sm:$0xff]
          %v2064 = vld [vmem:[#allocation6 + $0x3d0] sm:$0xff]
          %v2065 = vld [vmem:[#allocation6 + $0x3d8] sm:$0xff]
          %v2066 = vld [vmem:[#allocation6 + $0x3e0] sm:$0xff]
          %v2067 = vld [vmem:[#allocation6 + $0x3e8] sm:$0xff]
          %v2068 = vld [vmem:[#allocation6 + $0x3f0] sm:$0xff]
          %v2069 = vld [vmem:[#allocation6 + $0x3f8] sm:$0xff]
          %v2070 = vld [vmem:[#allocation6 + $0x400] sm:$0xff]
          %v2071 = vld [vmem:[#allocation6 + $0x408] sm:$0xff]
          %v2072 = vld [vmem:[#allocation6 + $0x410] sm:$0xff]
          %v2073 = vld [vmem:[#allocation6 + $0x418] sm:$0xff]
          %v2074 = vld [vmem:[#allocation6 + $0x420] sm:$0xff]
          %v2075 = vld [vmem:[#allocation6 + $0x428] sm:$0xff]
          %v2076 = vld [vmem:[#allocation6 + $0x430] sm:$0xff]
          %v2077 = vld [vmem:[#allocation6 + $0x438] sm:$0xff]
          %v2078 = vld [vmem:[#allocation6 + $0x440] sm:$0xff]
          %v2079 = vld [vmem:[#allocation6 + $0x448] sm:$0xff]
          %v2080 = vld [vmem:[#allocation6 + $0x450] sm:$0xff]
          %v2081 = vld [vmem:[#allocation6 + $0x458] sm:$0xff]
          %v2082 = vld [vmem:[#allocation6 + $0x460] sm:$0xff]
          %v2083 = vld [vmem:[#allocation6 + $0x468] sm:$0xff]
          %v2084 = vld [vmem:[#allocation6 + $0x470] sm:$0xff]
          %v2085 = vld [vmem:[#allocation6 + $0x478] sm:$0xff]
          %v2086 = vld [vmem:[#allocation6 + $0x480] sm:$0xff]
          %v2087 = vld [vmem:[#allocation6 + $0x488] sm:$0xff]
          %v2088 = vld [vmem:[#allocation6 + $0x490] sm:$0xff]
          %v2089 = vld [vmem:[#allocation6 + $0x498] sm:$0xff]
          %v2090 = vld [vmem:[#allocation6 + $0x4a0] sm:$0xff]
          %v2091 = vld [vmem:[#allocation6 + $0x4a8] sm:$0xff]
          %v2092 = vld [vmem:[#allocation6 + $0x4b0] sm:$0xff]
          %v2093 = vld [vmem:[#allocation6 + $0x4b8] sm:$0xff]
          %v2094 = vld [vmem:[#allocation6 + $0x4c0] sm:$0xff]
          %v2095 = vld [vmem:[#allocation6 + $0x4c8] sm:$0xff]
          %v2096 = vld [vmem:[#allocation6 + $0x4d0] sm:$0xff]
          %v2097 = vld [vmem:[#allocation6 + $0x4d8] sm:$0xff]
          %v2098 = vld [vmem:[#allocation6 + $0x4e0] sm:$0xff]
          %v2099 = vld [vmem:[#allocation6 + $0x4e8] sm:$0xff]
          %v2100 = vld [vmem:[#allocation6 + $0x4f0] sm:$0xff]
          %v2101 = vld [vmem:[#allocation6 + $0x4f8] sm:$0xff]
          %v2102 = vld [vmem:[%s7] sm:$0x1]
          %2103 = vmatprep.subr.mxu0 0.0
          %2104 = vmatpush1.msra.mxu0 %v1957
          %2105 = vmatprep.subr.mxu0 0.0
          %2106 = vmatpush1.msra.mxu0 %v1956
          %2107 = vmatprep.subr.mxu0 0.0
          %2108 = vmatpush1.msra.mxu0 %v1955
          %2109 = vmatprep.subr.mxu0 0.0
          %2110 = vmatpush1.msra.mxu0 %v1954
          %2111 = vmatprep.subr.mxu0 0.0
          %2112 = vmatpush1.msra.mxu0 %v1953
          %2113 = vmatprep.subr.mxu0 0.0
          %2114 = vmatpush1.msra.mxu0 %v1952
          %2115 = vmatprep.subr.mxu0 0.0
          %2116 = vmatpush1.msra.mxu0 %v1951
          %2117 = vmatprep.subr.mxu0 0.0
          %2118 = vmatpush1.msra.mxu0 %v1950
          %2119 = vmatprep.subr.mxu0 0.0
          %2120 = vmatpush1.msra.mxu0 %v1949
          %2121 = vmatprep.subr.mxu0 0.0
          %2122 = vmatpush1.msra.mxu0 %v1948
          %2123 = vmatprep.subr.mxu0 0.0
          %2124 = vmatpush1.msra.mxu0 %v1947
          %2125 = vmatprep.subr.mxu0 0.0
          %2126 = vmatpush1.msra.mxu0 %v1946
          %2127 = vmatprep.subr.mxu0 0.0
          %2128 = vmatpush1.msra.mxu0 %v1945
          %2129 = vmatprep.subr.mxu0 0.0
          %2130 = vmatpush1.msra.mxu0 %v1944
          %2131 = vmatprep.subr.mxu0 0.0
          %2132 = vmatpush1.msra.mxu0 %v1943
          %2133 = vmatprep.subr.mxu0 0.0
          %2134 = vmatpush1.msra.mxu0 %v1942
          %2135 = vmatprep.subr.mxu0 0.0
          %2136 = vmatpush2.msra.mxu0 %v1973
          %2137 = vmatprep.subr.mxu0 0.0
          %2138 = vmatpush2.msra.mxu0 %v1972
          %2139 = vmatprep.subr.mxu0 0.0
          %2140 = vmatpush2.msra.mxu0 %v1971
          %2141 = vmatprep.subr.mxu0 0.0
          %2142 = vmatpush2.msra.mxu0 %v1970
          %2143 = vmatprep.subr.mxu0 0.0
          %2144 = vmatpush2.msra.mxu0 %v1969
          %2145 = vmatprep.subr.mxu0 0.0
          %2146 = vmatpush2.msra.mxu0 %v1968
          %2147 = vmatprep.subr.mxu0 0.0
          %2148 = vmatpush2.msra.mxu0 %v1967
          %2149 = vmatprep.subr.mxu0 0.0
          %2150 = vmatpush2.msra.mxu0 %v1966
          %2151 = vmatprep.subr.mxu0 0.0
          %2152 = vmatpush2.msra.mxu0 %v1965
          %2153 = vmatprep.subr.mxu0 0.0
          %2154 = vmatpush2.msra.mxu0 %v1964
          %2155 = vmatprep.subr.mxu0 0.0
          %2156 = vmatpush2.msra.mxu0 %v1963
          %2157 = vmatprep.subr.mxu0 0.0
          %2158 = vmatpush2.msra.mxu0 %v1962
          %2159 = vmatprep.subr.mxu0 0.0
          %2160 = vmatpush2.msra.mxu0 %v1961
          %2161 = vmatprep.subr.mxu0 0.0
          %2162 = vmatpush2.msra.mxu0 %v1960
          %2163 = vmatprep.subr.mxu0 0.0
          %2164 = vmatpush2.msra.mxu0 %v1959
          %2165 = vmatprep.subr.mxu0 0.0
          %2166 = vmatpush2.msra.mxu0 %v1958
          %2167 = vmatprep.mubr.f32.mxu0 %v1933
          %2168 = vmatmul.mubr.f32.gmra.mxu0 %v1932
          %v2169 = vpop.f32.mrf.mxu0
          %v2170 = vadd.f32 %v2102, %v2169
          %v2171 = vpop.f32.mrf.mxu0
          %2172 = vdwg.mxu0
          %2173 = vmatprep.subr.mxu0 0.0
          %2174 = vmatpush1.msra.mxu0 %v1989
          %2175 = vmatprep.subr.mxu0 0.0
          %2176 = vmatpush1.msra.mxu0 %v1988
          %2177 = vmatprep.subr.mxu0 0.0
          %2178 = vmatpush1.msra.mxu0 %v1987
          %2179 = vmatprep.subr.mxu0 0.0
          %2180 = vmatpush1.msra.mxu0 %v1986
          %2181 = vmatprep.subr.mxu0 0.0
          %2182 = vmatpush1.msra.mxu0 %v1985
          %2183 = vmatprep.subr.mxu0 0.0
          %2184 = vmatpush1.msra.mxu0 %v1984
          %2185 = vmatprep.subr.mxu0 0.0
          %2186 = vmatpush1.msra.mxu0 %v1983
          %2187 = vmatprep.subr.mxu0 0.0
          %2188 = vmatpush1.msra.mxu0 %v1982
          %2189 = vmatprep.subr.mxu0 0.0
          %2190 = vmatpush1.msra.mxu0 %v1981
          %2191 = vmatprep.subr.mxu0 0.0
          %2192 = vmatpush1.msra.mxu0 %v1980
          %2193 = vmatprep.subr.mxu0 0.0
          %2194 = vmatpush1.msra.mxu0 %v1979
          %2195 = vmatprep.subr.mxu0 0.0
          %2196 = vmatpush1.msra.mxu0 %v1978
          %2197 = vmatprep.subr.mxu0 0.0
          %2198 = vmatpush1.msra.mxu0 %v1977
          %2199 = vmatprep.subr.mxu0 0.0
          %2200 = vmatpush1.msra.mxu0 %v1976
          %2201 = vmatprep.subr.mxu0 0.0
          %2202 = vmatpush1.msra.mxu0 %v1975
          %2203 = vmatprep.subr.mxu0 0.0
          %2204 = vmatpush1.msra.mxu0 %v1974
          %2205 = vmatprep.subr.mxu0 0.0
          %2206 = vmatpush2.msra.mxu0 %v2005
          %2207 = vmatprep.subr.mxu0 0.0
          %2208 = vmatpush2.msra.mxu0 %v2004
          %2209 = vmatprep.subr.mxu0 0.0
          %2210 = vmatpush2.msra.mxu0 %v2003
          %2211 = vmatprep.subr.mxu0 0.0
          %2212 = vmatpush2.msra.mxu0 %v2002
          %2213 = vmatprep.subr.mxu0 0.0
          %2214 = vmatpush2.msra.mxu0 %v2001
          %2215 = vmatprep.subr.mxu0 0.0
          %2216 = vmatpush2.msra.mxu0 %v2000
          %2217 = vmatprep.subr.mxu0 0.0
          %2218 = vmatpush2.msra.mxu0 %v1999
          %2219 = vmatprep.subr.mxu0 0.0
          %2220 = vmatpush2.msra.mxu0 %v1998
          %2221 = vmatprep.subr.mxu0 0.0
          %2222 = vmatpush2.msra.mxu0 %v1997
          %2223 = vmatprep.subr.mxu0 0.0
          %2224 = vmatpush2.msra.mxu0 %v1996
          %2225 = vmatprep.subr.mxu0 0.0
          %2226 = vmatpush2.msra.mxu0 %v1995
          %2227 = vmatprep.subr.mxu0 0.0
          %2228 = vmatpush2.msra.mxu0 %v1994
          %2229 = vmatprep.subr.mxu0 0.0
          %2230 = vmatpush2.msra.mxu0 %v1993
          %2231 = vmatprep.subr.mxu0 0.0
          %2232 = vmatpush2.msra.mxu0 %v1992
          %2233 = vmatprep.subr.mxu0 0.0
          %2234 = vmatpush2.msra.mxu0 %v1991
          %2235 = vmatprep.subr.mxu0 0.0
          %2236 = vmatpush2.msra.mxu0 %v1990
          %2237 = vmatprep.mubr.f32.mxu0 %v1935
          %2238 = vmatmul.mubr.f32.gmra.mxu0 %v1934
          %v2239 = vpop.f32.mrf.mxu0
          %v2240 = vadd.f32 %v2170, %v2239
          %v2241 = vpop.f32.mrf.mxu0
          %2242 = vdwg.mxu0
          %2243 = vmatprep.subr.mxu0 0.0
          %2244 = vmatpush1.msra.mxu0 %v2021
          %2245 = vmatprep.subr.mxu0 0.0
          %2246 = vmatpush1.msra.mxu0 %v2020
          %2247 = vmatprep.subr.mxu0 0.0
          %2248 = vmatpush1.msra.mxu0 %v2019
          %2249 = vmatprep.subr.mxu0 0.0
          %2250 = vmatpush1.msra.mxu0 %v2018
          %2251 = vmatprep.subr.mxu0 0.0
          %2252 = vmatpush1.msra.mxu0 %v2017
          %2253 = vmatprep.subr.mxu0 0.0
          %2254 = vmatpush1.msra.mxu0 %v2016
          %2255 = vmatprep.subr.mxu0 0.0
          %2256 = vmatpush1.msra.mxu0 %v2015
          %2257 = vmatprep.subr.mxu0 0.0
          %2258 = vmatpush1.msra.mxu0 %v2014
          %2259 = vmatprep.subr.mxu0 0.0
          %2260 = vmatpush1.msra.mxu0 %v2013
          %2261 = vmatprep.subr.mxu0 0.0
          %2262 = vmatpush1.msra.mxu0 %v2012
          %2263 = vmatprep.subr.mxu0 0.0
          %2264 = vmatpush1.msra.mxu0 %v2011
          %2265 = vmatprep.subr.mxu0 0.0
          %2266 = vmatpush1.msra.mxu0 %v2010
          %2267 = vmatprep.subr.mxu0 0.0
          %2268 = vmatpush1.msra.mxu0 %v2009
          %2269 = vmatprep.subr.mxu0 0.0
          %2270 = vmatpush1.msra.mxu0 %v2008
          %2271 = vmatprep.subr.mxu0 0.0
          %2272 = vmatpush1.msra.mxu0 %v2007
          %2273 = vmatprep.subr.mxu0 0.0
          %2274 = vmatpush1.msra.mxu0 %v2006
          %2275 = vmatprep.subr.mxu0 0.0
          %2276 = vmatpush2.msra.mxu0 %v2037
          %2277 = vmatprep.subr.mxu0 0.0
          %2278 = vmatpush2.msra.mxu0 %v2036
          %2279 = vmatprep.subr.mxu0 0.0
          %2280 = vmatpush2.msra.mxu0 %v2035
          %2281 = vmatprep.subr.mxu0 0.0
          %2282 = vmatpush2.msra.mxu0 %v2034
          %2283 = vmatprep.subr.mxu0 0.0
          %2284 = vmatpush2.msra.mxu0 %v2033
          %2285 = vmatprep.subr.mxu0 0.0
          %2286 = vmatpush2.msra.mxu0 %v2032
          %2287 = vmatprep.subr.mxu0 0.0
          %2288 = vmatpush2.msra.mxu0 %v2031
          %2289 = vmatprep.subr.mxu0 0.0
          %2290 = vmatpush2.msra.mxu0 %v2030
          %2291 = vmatprep.subr.mxu0 0.0
          %2292 = vmatpush2.msra.mxu0 %v2029
          %2293 = vmatprep.subr.mxu0 0.0
          %2294 = vmatpush2.msra.mxu0 %v2028
          %2295 = vmatprep.subr.mxu0 0.0
          %2296 = vmatpush2.msra.mxu0 %v2027
          %2297 = vmatprep.subr.mxu0 0.0
          %2298 = vmatpush2.msra.mxu0 %v2026
          %2299 = vmatprep.subr.mxu0 0.0
          %2300 = vmatpush2.msra.mxu0 %v2025
          %2301 = vmatprep.subr.mxu0 0.0
          %2302 = vmatpush2.msra.mxu0 %v2024
          %2303 = vmatprep.subr.mxu0 0.0
          %2304 = vmatpush2.msra.mxu0 %v2023
          %2305 = vmatprep.subr.mxu0 0.0
          %2306 = vmatpush2.msra.mxu0 %v2022
          %2307 = vmatprep.mubr.f32.mxu0 %v1937
          %2308 = vmatmul.mubr.f32.gmra.mxu0 %v1936
          %v2309 = vpop.f32.mrf.mxu0
          %v2310 = vadd.f32 %v2240, %v2309
          %v2311 = vpop.f32.mrf.mxu0
          %2312 = vdwg.mxu0
          %2313 = vmatprep.subr.mxu0 0.0
          %2314 = vmatpush1.msra.mxu0 %v2053
          %2315 = vmatprep.subr.mxu0 0.0
          %2316 = vmatpush1.msra.mxu0 %v2052
          %2317 = vmatprep.subr.mxu0 0.0
          %2318 = vmatpush1.msra.mxu0 %v2051
          %2319 = vmatprep.subr.mxu0 0.0
          %2320 = vmatpush1.msra.mxu0 %v2050
          %2321 = vmatprep.subr.mxu0 0.0
          %2322 = vmatpush1.msra.mxu0 %v2049
          %2323 = vmatprep.subr.mxu0 0.0
          %2324 = vmatpush1.msra.mxu0 %v2048
          %2325 = vmatprep.subr.mxu0 0.0
          %2326 = vmatpush1.msra.mxu0 %v2047
          %2327 = vmatprep.subr.mxu0 0.0
          %2328 = vmatpush1.msra.mxu0 %v2046
          %2329 = vmatprep.subr.mxu0 0.0
          %2330 = vmatpush1.msra.mxu0 %v2045
          %2331 = vmatprep.subr.mxu0 0.0
          %2332 = vmatpush1.msra.mxu0 %v2044
          %2333 = vmatprep.subr.mxu0 0.0
          %2334 = vmatpush1.msra.mxu0 %v2043
          %2335 = vmatprep.subr.mxu0 0.0
          %2336 = vmatpush1.msra.mxu0 %v2042
          %2337 = vmatprep.subr.mxu0 0.0
          %2338 = vmatpush1.msra.mxu0 %v2041
          %2339 = vmatprep.subr.mxu0 0.0
          %2340 = vmatpush1.msra.mxu0 %v2040
          %2341 = vmatprep.subr.mxu0 0.0
          %2342 = vmatpush1.msra.mxu0 %v2039
          %2343 = vmatprep.subr.mxu0 0.0
          %2344 = vmatpush1.msra.mxu0 %v2038
          %2345 = vmatprep.subr.mxu0 0.0
          %2346 = vmatpush2.msra.mxu0 %v2069
          %2347 = vmatprep.subr.mxu0 0.0
          %2348 = vmatpush2.msra.mxu0 %v2068
          %2349 = vmatprep.subr.mxu0 0.0
          %2350 = vmatpush2.msra.mxu0 %v2067
          %2351 = vmatprep.subr.mxu0 0.0
          %2352 = vmatpush2.msra.mxu0 %v2066
          %2353 = vmatprep.subr.mxu0 0.0
          %2354 = vmatpush2.msra.mxu0 %v2065
          %2355 = vmatprep.subr.mxu0 0.0
          %2356 = vmatpush2.msra.mxu0 %v2064
          %2357 = vmatprep.subr.mxu0 0.0
          %2358 = vmatpush2.msra.mxu0 %v2063
          %2359 = vmatprep.subr.mxu0 0.0
          %2360 = vmatpush2.msra.mxu0 %v2062
          %2361 = vmatprep.subr.mxu0 0.0
          %2362 = vmatpush2.msra.mxu0 %v2061
          %2363 = vmatprep.subr.mxu0 0.0
          %2364 = vmatpush2.msra.mxu0 %v2060
          %2365 = vmatprep.subr.mxu0 0.0
          %2366 = vmatpush2.msra.mxu0 %v2059
          %2367 = vmatprep.subr.mxu0 0.0
          %2368 = vmatpush2.msra.mxu0 %v2058
          %2369 = vmatprep.subr.mxu0 0.0
          %2370 = vmatpush2.msra.mxu0 %v2057
          %2371 = vmatprep.subr.mxu0 0.0
          %2372 = vmatpush2.msra.mxu0 %v2056
          %2373 = vmatprep.subr.mxu0 0.0
          %2374 = vmatpush2.msra.mxu0 %v2055
          %2375 = vmatprep.subr.mxu0 0.0
          %2376 = vmatpush2.msra.mxu0 %v2054
          %2377 = vmatprep.mubr.f32.mxu0 %v1939
          %2378 = vmatmul.mubr.f32.gmra.mxu0 %v1938
          %v2379 = vpop.f32.mrf.mxu0
          %v2380 = vadd.f32 %v2310, %v2379
          %v2381 = vpop.f32.mrf.mxu0
          %2382 = vdwg.mxu0
          %2383 = vmatprep.subr.mxu0 0.0
          %2384 = vmatpush1.msra.mxu0 %v2085
          %2385 = vmatprep.subr.mxu0 0.0
          %2386 = vmatpush1.msra.mxu0 %v2084
          %2387 = vmatprep.subr.mxu0 0.0
          %2388 = vmatpush1.msra.mxu0 %v2083
          %2389 = vmatprep.subr.mxu0 0.0
          %2390 = vmatpush1.msra.mxu0 %v2082
          %2391 = vmatprep.subr.mxu0 0.0
          %2392 = vmatpush1.msra.mxu0 %v2081
          %2393 = vmatprep.subr.mxu0 0.0
          %2394 = vmatpush1.msra.mxu0 %v2080
          %2395 = vmatprep.subr.mxu0 0.0
          %2396 = vmatpush1.msra.mxu0 %v2079
          %2397 = vmatprep.subr.mxu0 0.0
          %2398 = vmatpush1.msra.mxu0 %v2078
          %2399 = vmatprep.subr.mxu0 0.0
          %2400 = vmatpush1.msra.mxu0 %v2077
          %2401 = vmatprep.subr.mxu0 0.0
          %2402 = vmatpush1.msra.mxu0 %v2076
          %2403 = vmatprep.subr.mxu0 0.0
          %2404 = vmatpush1.msra.mxu0 %v2075
          %2405 = vmatprep.subr.mxu0 0.0
          %2406 = vmatpush1.msra.mxu0 %v2074
          %2407 = vmatprep.subr.mxu0 0.0
          %2408 = vmatpush1.msra.mxu0 %v2073
          %2409 = vmatprep.subr.mxu0 0.0
          %2410 = vmatpush1.msra.mxu0 %v2072
          %2411 = vmatprep.subr.mxu0 0.0
          %2412 = vmatpush1.msra.mxu0 %v2071
          %2413 = vmatprep.subr.mxu0 0.0
          %2414 = vmatpush1.msra.mxu0 %v2070
          %2415 = vmatprep.subr.mxu0 0.0
          %2416 = vmatpush2.msra.mxu0 %v2101
          %2417 = vmatprep.subr.mxu0 0.0
          %2418 = vmatpush2.msra.mxu0 %v2100
          %2419 = vmatprep.subr.mxu0 0.0
          %2420 = vmatpush2.msra.mxu0 %v2099
          %2421 = vmatprep.subr.mxu0 0.0
          %2422 = vmatpush2.msra.mxu0 %v2098
          %2423 = vmatprep.subr.mxu0 0.0
          %2424 = vmatpush2.msra.mxu0 %v2097
          %2425 = vmatprep.subr.mxu0 0.0
          %2426 = vmatpush2.msra.mxu0 %v2096
          %2427 = vmatprep.subr.mxu0 0.0
          %2428 = vmatpush2.msra.mxu0 %v2095
          %2429 = vmatprep.subr.mxu0 0.0
          %2430 = vmatpush2.msra.mxu0 %v2094
          %2431 = vmatprep.subr.mxu0 0.0
          %2432 = vmatpush2.msra.mxu0 %v2093
          %2433 = vmatprep.subr.mxu0 0.0
          %2434 = vmatpush2.msra.mxu0 %v2092
          %2435 = vmatprep.subr.mxu0 0.0
          %2436 = vmatpush2.msra.mxu0 %v2091
          %2437 = vmatprep.subr.mxu0 0.0
          %2438 = vmatpush2.msra.mxu0 %v2090
          %2439 = vmatprep.subr.mxu0 0.0
          %2440 = vmatpush2.msra.mxu0 %v2089
          %2441 = vmatprep.subr.mxu0 0.0
          %2442 = vmatpush2.msra.mxu0 %v2088
          %2443 = vmatprep.subr.mxu0 0.0
          %2444 = vmatpush2.msra.mxu0 %v2087
          %2445 = vmatprep.subr.mxu0 0.0
          %2446 = vmatpush2.msra.mxu0 %v2086
          %2447 = vmatprep.mubr.f32.mxu0 %v1941
          %2448 = vmatmul.mubr.f32.gmra.mxu0 %v1940
          %v2449 = vpop.f32.mrf.mxu0
          %v2450 = vadd.f32 %v2380, %v2449
          %v2451 = vpop.f32.mrf.mxu0
          %2452 = vdwg.mxu0
          %2453 = vst [vmem:[%s363] sm:$0x1] %v2450
        $region68: #{tpu_custom_call.1} parent=51 // pred_fallthru
          _
        %s2454 = sand.u32 %s224, 1
        %s2455 = scalar_lea.sflag [#allocation5], %s2454
        %s2456 = sand.u32 %s224, 1
        %s2457 = scalar_lea.vmem [#allocation8], %s2456
        // Predicated region
        $region69: #{tpu_custom_call.1} parent=51 // pred_check
          %p2458 = pneg %p234
        $region70: #{tpu_custom_call.1} parent=51 // pred_check_branch
          %2460 = sbr.rel (%p2458) target = $region72
        $region71: #{tpu_custom_call.1} parent=51 // pred_region
          %s2462 = ssub.s32 16, 16
          %2463 = vsyncadd %s2455, %s2462
          %s2464 = smul.addr %s28, 16
          %s2465 = scalar_lea.hbm %s8, %s2464
          %s2467 = sshll.u32 %s2457, 4
          %s2468 = int_to_ptr.vmem [resolvable:$true] %s2467
          %2470 = dma.vmem_to_hbm [thread:$0]  %s2468, 16, %s2465, %s2455
        $region72: #{tpu_custom_call.1} parent=51 // pred_fallthru
          _
      $region52: #{tpu_custom_call.1} parent=5 // pred_fallthru
        _
      %p2471 = scmp.le.s32.totalorder 2, %s19
      // Predicated region
      $region73: #{tpu_custom_call.1} parent=5 // pred_check
        %p2472 = pneg %p2471
      $region74: #{tpu_custom_call.1} parent=5 // pred_check_branch
        %2474 = sbr.rel (%p2472) target = $region76
      $region75: #{tpu_custom_call.1} parent=5 // pred_region
        %s2475 = ssub.s32 %s19, 2
        // Predicated region
        $region77: #{tpu_custom_call.1} parent=75 // pred_check
          %p2476 = pneg %p240
        $region78: #{tpu_custom_call.1} parent=75 // pred_check_branch
          %2478 = sbr.rel (%p2476) target = $region80
        $region79: #{tpu_custom_call.1} parent=75 // pred_region
          %s2479 = sand.u32 %s225, 1
          %s2480 = scalar_lea.sflag [#allocation5], %s2479
          %s2481 = sand.u32 %s225, 1
          %s2482 = scalar_lea.vmem [#allocation8], %s2481
          %2483 = dma.done %s2480, 16
        $region80: #{tpu_custom_call.1} parent=75 // pred_fallthru
          _
      $region76: #{tpu_custom_call.1} parent=5 // pred_fallthru
        _
    $region6: #{tpu_custom_call.1} parent=1 // loop_footer
      %s23 = sadd.s32 1, %s19
    $region7: #{tpu_custom_call.1} parent=1 // loop_footer_branch
      %18 = sbr.rel target = $region3
    $region8: #{tpu_custom_call.1} parent=1 // loop_exit
      _
    %2484 = vsyncpa [#allocation4], 1
    %s2485 = scalar_lea.sflag [#allocation4], 1
    %2486 = vsyncpa %s2485, 1
    %2487 = vsyncpa [#allocation7], 1
    %2488 = vsyncpa [#allocation5], 1
    %s2489 = scalar_lea.sflag [#allocation5], 1
    %2490 = vsyncpa %s2489, 1

</llo_original>
